<compile_context>
chip_gen: v6e
topology: v6e:2x2x1
jax: 0.10.0
libtpu: 0.0.40
codegen_flags: <defaults>
</compile_context>

<pallas_src>
import functools

import jax
import jax.numpy as jnp
from jax.experimental import pallas as pl
from jax.experimental.pallas import tpu as pltpu


# ----------------------------- Pallas kernel ------------------------------- #

def _pv_lstm_kernel(pred_len, hidden_dim,
                    pos_ref, speed_ref,
                    enc_wih_ref, enc_whh_ref, enc_b_ref,   # packed pos+speed encoders
                    dec_wih_ref, dec_whh_ref, dec_b_ref,   # packed speed+pos decoders
                    fc_w_ref, fc_b_ref,                    # packed shared fc head
                    pos_out_ref, speed_out_ref):
    H = hidden_dim
    T, B, D = pos_ref.shape
    f32 = jnp.float32

    # ---- hoist all weight / bias reads out of the loops ----
    Wih_e, Whh_e, b_e = enc_wih_ref[...], enc_whh_ref[...], enc_b_ref[...]
    Wih_d, Whh_d, b_d = dec_wih_ref[...], dec_whh_ref[...], dec_b_ref[...]
    Wfc, bfc = fc_w_ref[...], fc_b_ref[...]
    cdt = Whh_e.dtype            # matmul operand dtype (bf16); state stays f32

    pos_all = pos_ref[...]       # (T, B, D)
    spd_all = speed_ref[...]     # (T, B, D)

    # ---- encoder input projections for all T steps: batched, outside the recurrence.
    # Row blocks of the block-diagonal Wih_e keep each chain in its own gate columns,
    # so the two dots sum directly into the packed (B, 8H) layout (no lane concat).
    # NOTE: at module-default sizes (T=20, H=256, large B) this f32 slab can exceed
    # v5e's 16 MiB scoped-VMEM default / press v7x's 64 MiB; store it bf16, compute it
    # per step, or raise vmem_limit_bytes in that regime.
    xp_enc = (jnp.dot(pos_all.reshape(T * B, D).astype(cdt), Wih_e[:D],
                      preferred_element_type=f32)
              + jnp.dot(spd_all.reshape(T * B, D).astype(cdt), Wih_e[D:],
                        preferred_element_type=f32)
              + b_e).reshape(T, B, 8 * H)

    def fused_step(gates, c):
        """One LSTM step for BOTH packed chains.

        gates: (B, 8H) pre-activations with columns [i_a|i_b|f_a|f_b|2g_a|2g_b|o_a|o_b]
               (the x2 on the g block is baked into the packed weights/bias).
        c:     (B, 2H) packed cell state [c_a | c_b].
        One full-width sigmoid; tanh recovered via 2*sigmoid(2x) - 1.
        """
        s = jax.nn.sigmoid(gates)                         # single EUP pass over 8H
        i = s[:, 0 * H:2 * H]
        f = s[:, 2 * H:4 * H]
        g = 2.0 * s[:, 4 * H:6 * H] - 1.0                 # = tanh(pre_g)
        o = s[:, 6 * H:8 * H]
        c_new = f * c + i * g
        h_new = o * (2.0 * jax.nn.sigmoid(2.0 * c_new) - 1.0)   # = o * tanh(c_new)
        return h_new, c_new

    # ---- fused, fully-unrolled encoder recurrence (chain a = pos, chain b = speed).
    # TODO(synk): at module-default T=20 / pred_len=30, switch these Python unrolls to
    # lax.fori_loop(unroll=2-4) if vreg spills show up in the bundle dump.
    h = jnp.zeros((B, 2 * H), f32)
    c = jnp.zeros((B, 2 * H), f32)
    for t in range(T):
        gates = xp_enc[t] + jnp.dot(h.astype(cdt), Whh_e, preferred_element_type=f32)
        h, c = fused_step(gates, c)

    hpo, hsp = h[:, :H], h[:, H:]
    cpo, csp = c[:, :H], c[:, H:]

    # ---- decoders, packed: chain a = speed_decoder (state hpo+hsp), chain b =
    # pos_decoder (state continues from hpo). Loop-invariant input projection hoisted.
    hd = jnp.concatenate([hpo + hsp, hpo], axis=-1)       # (B, 2H)
    cd = jnp.concatenate([cpo + csp, cpo], axis=-1)       # (B, 2H)

    xp_dec = (jnp.dot(spd_all[T - 1].astype(cdt), Wih_d[:D], preferred_element_type=f32)
              + jnp.dot(pos_all[T - 1].astype(cdt), Wih_d[D:], preferred_element_type=f32)
              + b_d)                                      # (B, 8H), loop-invariant

    h_steps = []
    for _ in range(pred_len):
        gates = xp_dec + jnp.dot(hd.astype(cdt), Whh_d, preferred_element_type=f32)
        hd, cd = fused_step(gates, cd)
        h_steps.append(hd)

    # ---- fc head once, off the recurrence: (pred_len*B, 2H) @ (2H, 2D).
    # Block-diagonal Wfc maps chain a -> speed columns [:D], chain b -> pos columns [D:].
    h_all = jnp.concatenate(h_steps, axis=0)              # (pred_len*B, 2H)
    out = jnp.dot(h_all.astype(cdt), Wfc, preferred_element_type=f32) + bfc
    out = out.reshape(pred_len, B, 2 * D)
    speed_out_ref[...] = out[:, :, :D].astype(speed_out_ref.dtype)
    pos_out_ref[...] = out[:, :, D:].astype(pos_out_ref.dtype)


def pv_lstm_forward(pos, speed, kparams, pred_len, hidden_dim, batch_tile=None):
    """pos, speed: (T, B, D) float32. Returns (pos_outputs, speed_outputs),
    each (pred_len, B, D), matching the PyTorch module's return order.
    (The module's `seq_start_end` argument is unused by its forward and omitted.)"""
    T, B, D = pos.shape
    if batch_tile is None:
        # Shard large batches across grid tiles; on v7x the "parallel" axis lets the
        # two TensorCores split them. Small demo batches run as a single tile.
        batch_tile = 128 if (B >= 256 and B % 128 == 0) else B
    assert B % batch_tile == 0
    n_tiles = B // batch_tile

    weight_keys = ("enc_wih", "enc_whh", "enc_b",
                   "dec_wih", "dec_whh", "dec_b",
                   "fc_w", "fc_b")
    weights = [kparams[k] for k in weight_keys]

    seq_spec = pl.BlockSpec((T, batch_tile, D), lambda i: (0, i, 0))
    out_spec = pl.BlockSpec((pred_len, batch_tile, D), lambda i: (0, i, 0))
    w_specs = [pl.BlockSpec(w.shape, lambda i: (0, 0)) for w in weights]

    kernel = functools.partial(_pv_lstm_kernel, pred_len, hidden_dim)
    pos_out, speed_out = pl.pallas_call(
        kernel,
        grid=(n_tiles,),
        out_shape=(jax.ShapeDtypeStruct((pred_len, B, D), jnp.float32),
                   jax.ShapeDtypeStruct((pred_len, B, D), jnp.float32)),
        in_specs=[seq_spec, seq_spec] + w_specs,
        out_specs=(out_spec, out_spec),
        compiler_params=pltpu.CompilerParams(
            dimension_semantics=("parallel",)),
    )(pos, speed, *weights)
    return pos_out, speed_out


# ----------------------- parameter init / packing -------------------------- #

def init_raw_params(key, data_dim, hidden_dim):
    """PyTorch-layout parameters, deterministically initialized (uniform +-1/sqrt(H))."""
    H, D = hidden_dim, data_dim
    bound = 1.0 / (H ** 0.5)
    keys = iter(jax.random.split(key, 18))

    def u(shape):
        return jax.random.uniform(next(keys), shape, jnp.float32, -bound, bound)

    p = {}
    for name in ("pe", "se", "sd", "pd"):          # pos_enc, speed_enc, speed_dec, pos_dec
        p[f"{name}_wih"] = u((4 * H, D))           # (4H, input), gate order i,f,g,o
        p[f"{name}_whh"] = u((4 * H, H))           # (4H, H)
        p[f"{name}_bih"] = u((4 * H,))
        p[f"{name}_bhh"] = u((4 * H,))
    p["fc_w"] = u((D, H))                          # fc_speed weight (out, in)
    p["fc_b"] = u((D,))
    # TODO(synk): pos_embedding (Linear+ReLU) exists in __init__ but is never used in
    # forward(), so it is intentionally not materialized here.
    return p


def pack_kernel_params(raw, hidden_dim, matmul_dtype=jnp.bfloat16):
    """Pack PyTorch-layout params into the fused-chain kernel layout.

    Each (chain_a, chain_b) pair is packed block-diagonally BY GATE into columns
    [i_a|i_b|f_a|f_b|g_a|g_b|o_a|o_b] (each block H wide). The g-gate columns and
    bias lanes are pre-scaled by 2 so tanh(x) = 2*sigmoid(2x) - 1 costs nothing extra.
    Matmul weights are cast to `matmul_dtype` (bf16); biases stay f32.
    """
    H = hidden_dim

    def pair_by_gate(wa_t, wb_t):
        # wa_t: (Ka, 4H), wb_t: (Kb, 4H), columns [i|f|g|o] -> (Ka+Kb, 8H) block-diag.
        Ka, Kb = wa_t.shape[0], wb_t.shape[0]
        out = jnp.zeros((Ka + Kb, 8 * H), jnp.float32)
        for g in range(4):
            s = 2.0 if g == 2 else 1.0     # bake tanh-via-sigmoid prescale into g gate
            out = out.at[:Ka, (2 * g) * H:(2 * g + 1) * H].set(s * wa_t[:, g * H:(g + 1) * H])
            out = out.at[Ka:, (2 * g + 1) * H:(2 * g + 2) * H].set(s * wb_t[:, g * H:(g + 1) * H])
        return out

    def bias_by_gate(ba, bb):
        out = jnp.zeros((8 * H,), jnp.float32)
        for g in range(4):
            s = 2.0 if g == 2 else 1.0
            out = out.at[(2 * g) * H:(2 * g + 1) * H].set(s * ba[g * H:(g + 1) * H])
            out = out.at[(2 * g + 1) * H:(2 * g + 2) * H].set(s * bb[g * H:(g + 1) * H])
        return out[None, :]

    md = matmul_dtype
    k = {}
    # Encoder pair: chain a = pos_encoder, chain b = speed_encoder.
    k["enc_wih"] = pair_by_gate(raw["pe_wih"].T, raw["se_wih"].T).astype(md)   # (2D, 8H)
    k["enc_whh"] = pair_by_gate(raw["pe_whh"].T, raw["se_whh"].T).astype(md)   # (2H, 8H)
    k["enc_b"] = bias_by_gate(raw["pe_bih"] + raw["pe_bhh"],
                              raw["se_bih"] + raw["se_bhh"])                   # (1, 8H) f32
    # Decoder pair: chain a = speed_decoder, chain b = pos_decoder.
    k["dec_wih"] = pair_by_gate(raw["sd_wih"].T, raw["pd_wih"].T).astype(md)   # (2D, 8H)
    k["dec_whh"] = pair_by_gate(raw["sd_whh"].T, raw["pd_whh"].T).astype(md)   # (2H, 8H)
    k["dec_b"] = bias_by_gate(raw["sd_bih"] + raw["sd_bhh"],
                              raw["pd_bih"] + raw["pd_bhh"])                   # (1, 8H) f32
    # Shared fc head, block-diagonal: chain a (speed) -> cols [:D], chain b (pos) -> [D:].
    D = raw["fc_w"].shape[0]
    fc_t = raw["fc_w"].T                                                       # (H, D)
    fcw = jnp.zeros((2 * H, 2 * D), jnp.float32)
    fcw = fcw.at[:H, :D].set(fc_t).at[H:, D:].set(fc_t)
    k["fc_w"] = fcw.astype(md)                                                 # (2H, 2D)
    k["fc_b"] = jnp.concatenate([raw["fc_b"], raw["fc_b"]])[None, :]           # (1, 2D) f32
    return k


# ------------------------------- references -------------------------------- #

def ref_forward(pos, speed, p, pred_len, H, matmul_dtype=jnp.float32):
    """Pure-JAX reference replicating the PyTorch forward.

    With matmul_dtype=bf16 it matches the kernel's matmul precision (f32 accumulation,
    f32 state); with f32 + HIGHEST precision it is the exact module semantics."""
    md = matmul_dtype
    prec = jax.lax.Precision.HIGHEST if md == jnp.float32 else None

    def mm(a, b):
        return jnp.dot(a.astype(md), b.astype(md),
                       preferred_element_type=jnp.float32, precision=prec)

    def cell(x, h, c, wih, whh, bih, bhh):
        gates = mm(x, wih.T) + bih + mm(h, whh.T) + bhh
        i = jax.nn.sigmoid(gates[:, :H])
        f = jax.nn.sigmoid(gates[:, H:2 * H])
        g = jnp.tanh(gates[:, 2 * H:3 * H])
        o = jax.nn.sigmoid(gates[:, 3 * H:])
        c = f * c + i * g
        h = o * jnp.tanh(c)
        return h, c

    T, B, D = pos.shape
    z = jnp.zeros((B, H), jnp.float32)
    hpo, cpo = z, z
    for t in range(T):
        hpo, cpo = cell(pos[t], hpo, cpo, p["pe_wih"], p["pe_whh"],
                        p["pe_bih"], p["pe_bhh"])
    hsp, csp = z, z
    for t in range(T):
        hsp, csp = cell(speed[t], hsp, csp, p["se_wih"], p["se_whh"],
                        p["se_bih"], p["se_bhh"])

    in_sp, in_pos = speed[-1], pos[-1]
    hds, cds = hpo + hsp, cpo + csp
    sp_outs, pos_outs = [], []
    for _ in range(pred_len):
        hds, cds = cell(in_sp, hds, cds, p["sd_wih"], p["sd_whh"],
                        p["sd_bih"], p["sd_bhh"])
        sp_outs.append(mm(hds, p["fc_w"].T) + p["fc_b"])
        hpo, cpo = cell(in_pos, hpo, cpo, p["pd_wih"], p["pd_whh"],
                        p["pd_bih"], p["pd_bhh"])
        pos_outs.append(mm(hpo, p["fc_w"].T) + p["fc_b"])
    return jnp.stack(pos_outs, 0), jnp.stack(sp_outs, 0)


# ----------------------------------- main ---------------------------------- #

if __name__ == "__main__":
    DATA_DIM = 2     # (x, y) as in the module
    HIDDEN = 32      # small hidden_dim (module default is 256)
    SEQ = 8          # small observation length (module expects e.g. 20)
    BATCH = 8
    PRED_LEN = 4     # small pred_len (module default is 30)

    key = jax.random.PRNGKey(0)
    kparam, kpos, kspeed = jax.random.split(key, 3)

    raw = init_raw_params(kparam, DATA_DIM, HIDDEN)
    kparams = pack_kernel_params(raw, HIDDEN, matmul_dtype=jnp.bfloat16)

    pos = jax.random.normal(kpos, (SEQ, BATCH, DATA_DIM), jnp.float32)
    speed = jax.random.normal(kspeed, (SEQ, BATCH, DATA_DIM), jnp.float32)

    pos_out, speed_out = pv_lstm_forward(pos, speed, kparams, PRED_LEN, HIDDEN)
    jax.block_until_ready((pos_out, speed_out))

    assert pos_out.shape == (PRED_LEN, BATCH, DATA_DIM)
    assert speed_out.shape == (PRED_LEN, BATCH, DATA_DIM)

    # Tight check vs a matched-precision reference (bf16 matmul operands, f32 state).
    ref_pos_m, ref_speed_m = ref_forward(pos, speed, raw, PRED_LEN, HIDDEN,
                                         matmul_dtype=jnp.bfloat16)
    assert jnp.allclose(pos_out, ref_pos_m, atol=1e-2, rtol=1e-2), "pos mismatch (matched)"
    assert jnp.allclose(speed_out, ref_speed_m, atol=1e-2, rtol=1e-2), "speed mismatch (matched)"

    # Loose sanity check vs the exact f32 PyTorch semantics (kernel uses bf16 operands).
    ref_pos, ref_speed = ref_forward(pos, speed, raw, PRED_LEN, HIDDEN,
                                     matmul_dtype=jnp.float32)
    assert jnp.allclose(pos_out, ref_pos, atol=0.1, rtol=0.1), "pos mismatch (exact f32)"
    assert jnp.allclose(speed_out, ref_speed, atol=0.1, rtol=0.1), "speed mismatch (exact f32)"

    print("KERNEL_OK")
</pallas_src>

<mosaic_0001>
module attributes {stable_mosaic.version = 11 : i64} {
  func.func @_pv_lstm_kernel(%arg0: i32, %arg1: memref<8x8x2xf32, #tpu.memory_space<vmem>>, %arg2: memref<8x8x2xf32, #tpu.memory_space<vmem>>, %arg3: memref<4x256xbf16, #tpu.memory_space<vmem>>, %arg4: memref<64x256xbf16, #tpu.memory_space<vmem>>, %arg5: memref<1x256xf32, #tpu.memory_space<vmem>>, %arg6: memref<4x256xbf16, #tpu.memory_space<vmem>>, %arg7: memref<64x256xbf16, #tpu.memory_space<vmem>>, %arg8: memref<1x256xf32, #tpu.memory_space<vmem>>, %arg9: memref<64x4xbf16, #tpu.memory_space<vmem>>, %arg10: memref<1x4xf32, #tpu.memory_space<vmem>>, %arg11: memref<4x8x2xf32, #tpu.memory_space<vmem>>, %arg12: memref<4x8x2xf32, #tpu.memory_space<vmem>>) attributes {dimension_semantics = [#tpu.dimension_semantics<parallel>], iteration_bounds = array<i64: 1>, scalar_prefetch = 0 : i64, scratch_operands = 0 : i64, tpu.core_type = #tpu.core_type<tc>, window_params = [{transform_indices = @transform_0, window_bounds = array<i64: 8, 8, 2>}, {transform_indices = @transform_1, window_bounds = array<i64: 8, 8, 2>}, {pipeline_mode = #tpu.pipeline_mode<synchronous>, transform_indices = @transform_2, window_bounds = array<i64: 4, 256>}, {pipeline_mode = #tpu.pipeline_mode<synchronous>, transform_indices = @transform_3, window_bounds = array<i64: 64, 256>}, {pipeline_mode = #tpu.pipeline_mode<synchronous>, transform_indices = @transform_4, window_bounds = array<i64: 1, 256>}, {pipeline_mode = #tpu.pipeline_mode<synchronous>, transform_indices = @transform_5, window_bounds = array<i64: 4, 256>}, {pipeline_mode = #tpu.pipeline_mode<synchronous>, transform_indices = @transform_6, window_bounds = array<i64: 64, 256>}, {pipeline_mode = #tpu.pipeline_mode<synchronous>, transform_indices = @transform_7, window_bounds = array<i64: 1, 256>}, {pipeline_mode = #tpu.pipeline_mode<synchronous>, transform_indices = @transform_8, window_bounds = array<i64: 64, 4>}, {pipeline_mode = #tpu.pipeline_mode<synchronous>, transform_indices = @transform_9, window_bounds = array<i64: 1, 4>}, {transform_indices = @transform_10, window_bounds = array<i64: 4, 8, 2>}, {transform_indices = @transform_11, window_bounds = array<i64: 4, 8, 2>}]} {
    %c0 = arith.constant 0 : index
    %c0_0 = arith.constant 0 : index
    %0 = vector.load %arg3[%c0, %c0_0] : memref<4x256xbf16, #tpu.memory_space<vmem>>, vector<4x256xbf16>
    %c0_1 = arith.constant 0 : index
    %c0_2 = arith.constant 0 : index
    %1 = vector.load %arg4[%c0_1, %c0_2] : memref<64x256xbf16, #tpu.memory_space<vmem>>, vector<64x256xbf16>
    %c0_3 = arith.constant 0 : index
    %c0_4 = arith.constant 0 : index
    %2 = vector.load %arg5[%c0_3, %c0_4] : memref<1x256xf32, #tpu.memory_space<vmem>>, vector<1x256xf32>
    %c0_5 = arith.constant 0 : index
    %c0_6 = arith.constant 0 : index
    %3 = vector.load %arg6[%c0_5, %c0_6] : memref<4x256xbf16, #tpu.memory_space<vmem>>, vector<4x256xbf16>
    %c0_7 = arith.constant 0 : index
    %c0_8 = arith.constant 0 : index
    %4 = vector.load %arg7[%c0_7, %c0_8] : memref<64x256xbf16, #tpu.memory_space<vmem>>, vector<64x256xbf16>
    %c0_9 = arith.constant 0 : index
    %c0_10 = arith.constant 0 : index
    %5 = vector.load %arg8[%c0_9, %c0_10] : memref<1x256xf32, #tpu.memory_space<vmem>>, vector<1x256xf32>
    %c0_11 = arith.constant 0 : index
    %c0_12 = arith.constant 0 : index
    %6 = vector.load %arg9[%c0_11, %c0_12] : memref<64x4xbf16, #tpu.memory_space<vmem>>, vector<64x4xbf16>
    %c0_13 = arith.constant 0 : index
    %c0_14 = arith.constant 0 : index
    %7 = vector.load %arg10[%c0_13, %c0_14] : memref<1x4xf32, #tpu.memory_space<vmem>>, vector<1x4xf32>
    %c0_15 = arith.constant 0 : index
    %c0_16 = arith.constant 0 : index
    %c0_17 = arith.constant 0 : index
    %8 = vector.load %arg1[%c0_15, %c0_16, %c0_17] : memref<8x8x2xf32, #tpu.memory_space<vmem>>, vector<8x8x2xf32>
    %c0_18 = arith.constant 0 : index
    %c0_19 = arith.constant 0 : index
    %c0_20 = arith.constant 0 : index
    %9 = vector.load %arg2[%c0_18, %c0_19, %c0_20] : memref<8x8x2xf32, #tpu.memory_space<vmem>>, vector<8x8x2xf32>
    %10 = vector.shape_cast %8 : vector<8x8x2xf32> to vector<64x2xf32>
    %11 = arith.truncf %10 : vector<64x2xf32> to vector<64x2xbf16>
    %12 = vector.extract_strided_slice %0 {offsets = [0, 0], sizes = [2, 256], strides = [1, 1]} : vector<4x256xbf16> to vector<2x256xbf16>
    %cst = arith.constant dense<0.000000e+00> : vector<64x256xf32>
    %13 = tpu.matmul %11, %12, %cst {dimension_numbers = #tpu.dot_dimension_numbers<[1], [0], [0], [1], [0, 0, 1, 1], [], []>} : vector<64x2xbf16>, vector<2x256xbf16>, vector<64x256xf32> -> vector<64x256xf32>
    %14 = vector.shape_cast %9 : vector<8x8x2xf32> to vector<64x2xf32>
    %15 = arith.truncf %14 : vector<64x2xf32> to vector<64x2xbf16>
    %16 = vector.extract_strided_slice %0 {offsets = [2, 0], sizes = [2, 256], strides = [1, 1]} : vector<4x256xbf16> to vector<2x256xbf16>
    %cst_21 = arith.constant dense<0.000000e+00> : vector<64x256xf32>
    %17 = tpu.matmul %15, %16, %cst_21 {dimension_numbers = #tpu.dot_dimension_numbers<[1], [0], [0], [1], [0, 0, 1, 1], [], []>} : vector<64x2xbf16>, vector<2x256xbf16>, vector<64x256xf32> -> vector<64x256xf32>
    %18 = arith.addf %13, %17 : vector<64x256xf32>
    %19 = vector.broadcast %2 : vector<1x256xf32> to vector<64x256xf32>
    %20 = arith.addf %18, %19 : vector<64x256xf32>
    %21 = vector.shape_cast %20 : vector<64x256xf32> to vector<8x8x256xf32>
    %cst_22 = arith.constant 0.000000e+00 : f32
    %22 = vector.broadcast %cst_22 : f32 to vector<8x64xf32>
    %cst_23 = arith.constant 0.000000e+00 : f32
    %23 = vector.broadcast %cst_23 : f32 to vector<8x64xf32>
    %24 = vector.extract_strided_slice %21 {offsets = [0, 0, 0], sizes = [1, 8, 256], strides = [1, 1, 1]} : vector<8x8x256xf32> to vector<1x8x256xf32>
    %25 = vector.shape_cast %24 : vector<1x8x256xf32> to vector<8x256xf32>
    %26 = arith.truncf %22 : vector<8x64xf32> to vector<8x64xbf16>
    %cst_24 = arith.constant dense<0.000000e+00> : vector<8x256xf32>
    %27 = tpu.matmul %26, %1, %cst_24 {dimension_numbers = #tpu.dot_dimension_numbers<[1], [0], [0], [1], [0, 0, 1, 1], [], []>} : vector<8x64xbf16>, vector<64x256xbf16>, vector<8x256xf32> -> vector<8x256xf32>
    %28 = arith.addf %25, %27 : vector<8x256xf32>
    %29 = arith.negf %28 : vector<8x256xf32>
    %30 = math.exp %29 : vector<8x256xf32>
    %cst_25 = arith.constant 1.000000e+00 : f32
    %31 = vector.broadcast %cst_25 : f32 to vector<8x256xf32>
    %32 = arith.addf %31, %30 : vector<8x256xf32>
    %33 = arith.divf %31, %32 : vector<8x256xf32>
    %34 = vector.extract_strided_slice %33 {offsets = [0, 0], sizes = [8, 64], strides = [1, 1]} : vector<8x256xf32> to vector<8x64xf32>
    %35 = vector.extract_strided_slice %33 {offsets = [0, 64], sizes = [8, 64], strides = [1, 1]} : vector<8x256xf32> to vector<8x64xf32>
    %36 = vector.extract_strided_slice %33 {offsets = [0, 128], sizes = [8, 64], strides = [1, 1]} : vector<8x256xf32> to vector<8x64xf32>
    %cst_26 = arith.constant 2.000000e+00 : f32
    %37 = vector.broadcast %cst_26 : f32 to vector<8x64xf32>
    %38 = arith.mulf %37, %36 : vector<8x64xf32>
    %cst_27 = arith.constant 1.000000e+00 : f32
    %39 = vector.broadcast %cst_27 : f32 to vector<8x64xf32>
    %40 = arith.subf %38, %39 : vector<8x64xf32>
    %41 = vector.extract_strided_slice %33 {offsets = [0, 192], sizes = [8, 64], strides = [1, 1]} : vector<8x256xf32> to vector<8x64xf32>
    %42 = arith.mulf %35, %23 : vector<8x64xf32>
    %43 = arith.mulf %34, %40 : vector<8x64xf32>
    %44 = arith.addf %42, %43 : vector<8x64xf32>
    %cst_28 = arith.constant 2.000000e+00 : f32
    %45 = vector.broadcast %cst_28 : f32 to vector<8x64xf32>
    %46 = arith.mulf %45, %44 : vector<8x64xf32>
    %47 = arith.negf %46 : vector<8x64xf32>
    %48 = math.exp %47 : vector<8x64xf32>
    %cst_29 = arith.constant 1.000000e+00 : f32
    %49 = vector.broadcast %cst_29 : f32 to vector<8x64xf32>
    %50 = arith.addf %49, %48 : vector<8x64xf32>
    %51 = arith.divf %49, %50 : vector<8x64xf32>
    %cst_30 = arith.constant 2.000000e+00 : f32
    %52 = vector.broadcast %cst_30 : f32 to vector<8x64xf32>
    %53 = arith.mulf %52, %51 : vector<8x64xf32>
    %cst_31 = arith.constant 1.000000e+00 : f32
    %54 = vector.broadcast %cst_31 : f32 to vector<8x64xf32>
    %55 = arith.subf %53, %54 : vector<8x64xf32>
    %56 = arith.mulf %41, %55 : vector<8x64xf32>
    %57 = vector.extract_strided_slice %21 {offsets = [1, 0, 0], sizes = [1, 8, 256], strides = [1, 1, 1]} : vector<8x8x256xf32> to vector<1x8x256xf32>
    %58 = vector.shape_cast %57 : vector<1x8x256xf32> to vector<8x256xf32>
    %59 = arith.truncf %56 : vector<8x64xf32> to vector<8x64xbf16>
    %cst_32 = arith.constant dense<0.000000e+00> : vector<8x256xf32>
    %60 = tpu.matmul %59, %1, %cst_32 {dimension_numbers = #tpu.dot_dimension_numbers<[1], [0], [0], [1], [0, 0, 1, 1], [], []>} : vector<8x64xbf16>, vector<64x256xbf16>, vector<8x256xf32> -> vector<8x256xf32>
    %61 = arith.addf %58, %60 : vector<8x256xf32>
    %62 = arith.negf %61 : vector<8x256xf32>
    %63 = math.exp %62 : vector<8x256xf32>
    %cst_33 = arith.constant 1.000000e+00 : f32
    %64 = vector.broadcast %cst_33 : f32 to vector<8x256xf32>
    %65 = arith.addf %64, %63 : vector<8x256xf32>
    %66 = arith.divf %64, %65 : vector<8x256xf32>
    %67 = vector.extract_strided_slice %66 {offsets = [0, 0], sizes = [8, 64], strides = [1, 1]} : vector<8x256xf32> to vector<8x64xf32>
    %68 = vector.extract_strided_slice %66 {offsets = [0, 64], sizes = [8, 64], strides = [1, 1]} : vector<8x256xf32> to vector<8x64xf32>
    %69 = vector.extract_strided_slice %66 {offsets = [0, 128], sizes = [8, 64], strides = [1, 1]} : vector<8x256xf32> to vector<8x64xf32>
    %cst_34 = arith.constant 2.000000e+00 : f32
    %70 = vector.broadcast %cst_34 : f32 to vector<8x64xf32>
    %71 = arith.mulf %70, %69 : vector<8x64xf32>
    %cst_35 = arith.constant 1.000000e+00 : f32
    %72 = vector.broadcast %cst_35 : f32 to vector<8x64xf32>
    %73 = arith.subf %71, %72 : vector<8x64xf32>
    %74 = vector.extract_strided_slice %66 {offsets = [0, 192], sizes = [8, 64], strides = [1, 1]} : vector<8x256xf32> to vector<8x64xf32>
    %75 = arith.mulf %68, %44 : vector<8x64xf32>
    %76 = arith.mulf %67, %73 : vector<8x64xf32>
    %77 = arith.addf %75, %76 : vector<8x64xf32>
    %cst_36 = arith.constant 2.000000e+00 : f32
    %78 = vector.broadcast %cst_36 : f32 to vector<8x64xf32>
    %79 = arith.mulf %78, %77 : vector<8x64xf32>
    %80 = arith.negf %79 : vector<8x64xf32>
    %81 = math.exp %80 : vector<8x64xf32>
    %cst_37 = arith.constant 1.000000e+00 : f32
    %82 = vector.broadcast %cst_37 : f32 to vector<8x64xf32>
    %83 = arith.addf %82, %81 : vector<8x64xf32>
    %84 = arith.divf %82, %83 : vector<8x64xf32>
    %cst_38 = arith.constant 2.000000e+00 : f32
    %85 = vector.broadcast %cst_38 : f32 to vector<8x64xf32>
    %86 = arith.mulf %85, %84 : vector<8x64xf32>
    %cst_39 = arith.constant 1.000000e+00 : f32
    %87 = vector.broadcast %cst_39 : f32 to vector<8x64xf32>
    %88 = arith.subf %86, %87 : vector<8x64xf32>
    %89 = arith.mulf %74, %88 : vector<8x64xf32>
    %90 = vector.extract_strided_slice %21 {offsets = [2, 0, 0], sizes = [1, 8, 256], strides = [1, 1, 1]} : vector<8x8x256xf32> to vector<1x8x256xf32>
    %91 = vector.shape_cast %90 : vector<1x8x256xf32> to vector<8x256xf32>
    %92 = arith.truncf %89 : vector<8x64xf32> to vector<8x64xbf16>
    %cst_40 = arith.constant dense<0.000000e+00> : vector<8x256xf32>
    %93 = tpu.matmul %92, %1, %cst_40 {dimension_numbers = #tpu.dot_dimension_numbers<[1], [0], [0], [1], [0, 0, 1, 1], [], []>} : vector<8x64xbf16>, vector<64x256xbf16>, vector<8x256xf32> -> vector<8x256xf32>
    %94 = arith.addf %91, %93 : vector<8x256xf32>
    %95 = arith.negf %94 : vector<8x256xf32>
    %96 = math.exp %95 : vector<8x256xf32>
    %cst_41 = arith.constant 1.000000e+00 : f32
    %97 = vector.broadcast %cst_41 : f32 to vector<8x256xf32>
    %98 = arith.addf %97, %96 : vector<8x256xf32>
    %99 = arith.divf %97, %98 : vector<8x256xf32>
    %100 = vector.extract_strided_slice %99 {offsets = [0, 0], sizes = [8, 64], strides = [1, 1]} : vector<8x256xf32> to vector<8x64xf32>
    %101 = vector.extract_strided_slice %99 {offsets = [0, 64], sizes = [8, 64], strides = [1, 1]} : vector<8x256xf32> to vector<8x64xf32>
    %102 = vector.extract_strided_slice %99 {offsets = [0, 128], sizes = [8, 64], strides = [1, 1]} : vector<8x256xf32> to vector<8x64xf32>
    %cst_42 = arith.constant 2.000000e+00 : f32
    %103 = vector.broadcast %cst_42 : f32 to vector<8x64xf32>
    %104 = arith.mulf %103, %102 : vector<8x64xf32>
    %cst_43 = arith.constant 1.000000e+00 : f32
    %105 = vector.broadcast %cst_43 : f32 to vector<8x64xf32>
    %106 = arith.subf %104, %105 : vector<8x64xf32>
    %107 = vector.extract_strided_slice %99 {offsets = [0, 192], sizes = [8, 64], strides = [1, 1]} : vector<8x256xf32> to vector<8x64xf32>
    %108 = arith.mulf %101, %77 : vector<8x64xf32>
    %109 = arith.mulf %100, %106 : vector<8x64xf32>
    %110 = arith.addf %108, %109 : vector<8x64xf32>
    %cst_44 = arith.constant 2.000000e+00 : f32
    %111 = vector.broadcast %cst_44 : f32 to vector<8x64xf32>
    %112 = arith.mulf %111, %110 : vector<8x64xf32>
    %113 = arith.negf %112 : vector<8x64xf32>
    %114 = math.exp %113 : vector<8x64xf32>
    %cst_45 = arith.constant 1.000000e+00 : f32
    %115 = vector.broadcast %cst_45 : f32 to vector<8x64xf32>
    %116 = arith.addf %115, %114 : vector<8x64xf32>
    %117 = arith.divf %115, %116 : vector<8x64xf32>
    %cst_46 = arith.constant 2.000000e+00 : f32
    %118 = vector.broadcast %cst_46 : f32 to vector<8x64xf32>
    %119 = arith.mulf %118, %117 : vector<8x64xf32>
    %cst_47 = arith.constant 1.000000e+00 : f32
    %120 = vector.broadcast %cst_47 : f32 to vector<8x64xf32>
    %121 = arith.subf %119, %120 : vector<8x64xf32>
    %122 = arith.mulf %107, %121 : vector<8x64xf32>
    %123 = vector.extract_strided_slice %21 {offsets = [3, 0, 0], sizes = [1, 8, 256], strides = [1, 1, 1]} : vector<8x8x256xf32> to vector<1x8x256xf32>
    %124 = vector.shape_cast %123 : vector<1x8x256xf32> to vector<8x256xf32>
    %125 = arith.truncf %122 : vector<8x64xf32> to vector<8x64xbf16>
    %cst_48 = arith.constant dense<0.000000e+00> : vector<8x256xf32>
    %126 = tpu.matmul %125, %1, %cst_48 {dimension_numbers = #tpu.dot_dimension_numbers<[1], [0], [0], [1], [0, 0, 1, 1], [], []>} : vector<8x64xbf16>, vector<64x256xbf16>, vector<8x256xf32> -> vector<8x256xf32>
    %127 = arith.addf %124, %126 : vector<8x256xf32>
    %128 = arith.negf %127 : vector<8x256xf32>
    %129 = math.exp %128 : vector<8x256xf32>
    %cst_49 = arith.constant 1.000000e+00 : f32
    %130 = vector.broadcast %cst_49 : f32 to vector<8x256xf32>
    %131 = arith.addf %130, %129 : vector<8x256xf32>
    %132 = arith.divf %130, %131 : vector<8x256xf32>
    %133 = vector.extract_strided_slice %132 {offsets = [0, 0], sizes = [8, 64], strides = [1, 1]} : vector<8x256xf32> to vector<8x64xf32>
    %134 = vector.extract_strided_slice %132 {offsets = [0, 64], sizes = [8, 64], strides = [1, 1]} : vector<8x256xf32> to vector<8x64xf32>
    %135 = vector.extract_strided_slice %132 {offsets = [0, 128], sizes = [8, 64], strides = [1, 1]} : vector<8x256xf32> to vector<8x64xf32>
    %cst_50 = arith.constant 2.000000e+00 : f32
    %136 = vector.broadcast %cst_50 : f32 to vector<8x64xf32>
    %137 = arith.mulf %136, %135 : vector<8x64xf32>
    %cst_51 = arith.constant 1.000000e+00 : f32
    %138 = vector.broadcast %cst_51 : f32 to vector<8x64xf32>
    %139 = arith.subf %137, %138 : vector<8x64xf32>
    %140 = vector.extract_strided_slice %132 {offsets = [0, 192], sizes = [8, 64], strides = [1, 1]} : vector<8x256xf32> to vector<8x64xf32>
    %141 = arith.mulf %134, %110 : vector<8x64xf32>
    %142 = arith.mulf %133, %139 : vector<8x64xf32>
    %143 = arith.addf %141, %142 : vector<8x64xf32>
    %cst_52 = arith.constant 2.000000e+00 : f32
    %144 = vector.broadcast %cst_52 : f32 to vector<8x64xf32>
    %145 = arith.mulf %144, %143 : vector<8x64xf32>
    %146 = arith.negf %145 : vector<8x64xf32>
    %147 = math.exp %146 : vector<8x64xf32>
    %cst_53 = arith.constant 1.000000e+00 : f32
    %148 = vector.broadcast %cst_53 : f32 to vector<8x64xf32>
    %149 = arith.addf %148, %147 : vector<8x64xf32>
    %150 = arith.divf %148, %149 : vector<8x64xf32>
    %cst_54 = arith.constant 2.000000e+00 : f32
    %151 = vector.broadcast %cst_54 : f32 to vector<8x64xf32>
    %152 = arith.mulf %151, %150 : vector<8x64xf32>
    %cst_55 = arith.constant 1.000000e+00 : f32
    %153 = vector.broadcast %cst_55 : f32 to vector<8x64xf32>
    %154 = arith.subf %152, %153 : vector<8x64xf32>
    %155 = arith.mulf %140, %154 : vector<8x64xf32>
    %156 = vector.extract_strided_slice %21 {offsets = [4, 0, 0], sizes = [1, 8, 256], strides = [1, 1, 1]} : vector<8x8x256xf32> to vector<1x8x256xf32>
    %157 = vector.shape_cast %156 : vector<1x8x256xf32> to vector<8x256xf32>
    %158 = arith.truncf %155 : vector<8x64xf32> to vector<8x64xbf16>
    %cst_56 = arith.constant dense<0.000000e+00> : vector<8x256xf32>
    %159 = tpu.matmul %158, %1, %cst_56 {dimension_numbers = #tpu.dot_dimension_numbers<[1], [0], [0], [1], [0, 0, 1, 1], [], []>} : vector<8x64xbf16>, vector<64x256xbf16>, vector<8x256xf32> -> vector<8x256xf32>
    %160 = arith.addf %157, %159 : vector<8x256xf32>
    %161 = arith.negf %160 : vector<8x256xf32>
    %162 = math.exp %161 : vector<8x256xf32>
    %cst_57 = arith.constant 1.000000e+00 : f32
    %163 = vector.broadcast %cst_57 : f32 to vector<8x256xf32>
    %164 = arith.addf %163, %162 : vector<8x256xf32>
    %165 = arith.divf %163, %164 : vector<8x256xf32>
    %166 = vector.extract_strided_slice %165 {offsets = [0, 0], sizes = [8, 64], strides = [1, 1]} : vector<8x256xf32> to vector<8x64xf32>
    %167 = vector.extract_strided_slice %165 {offsets = [0, 64], sizes = [8, 64], strides = [1, 1]} : vector<8x256xf32> to vector<8x64xf32>
    %168 = vector.extract_strided_slice %165 {offsets = [0, 128], sizes = [8, 64], strides = [1, 1]} : vector<8x256xf32> to vector<8x64xf32>
    %cst_58 = arith.constant 2.000000e+00 : f32
    %169 = vector.broadcast %cst_58 : f32 to vector<8x64xf32>
    %170 = arith.mulf %169, %168 : vector<8x64xf32>
    %cst_59 = arith.constant 1.000000e+00 : f32
    %171 = vector.broadcast %cst_59 : f32 to vector<8x64xf32>
    %172 = arith.subf %170, %171 : vector<8x64xf32>
    %173 = vector.extract_strided_slice %165 {offsets = [0, 192], sizes = [8, 64], strides = [1, 1]} : vector<8x256xf32> to vector<8x64xf32>
    %174 = arith.mulf %167, %143 : vector<8x64xf32>
    %175 = arith.mulf %166, %172 : vector<8x64xf32>
    %176 = arith.addf %174, %175 : vector<8x64xf32>
    %cst_60 = arith.constant 2.000000e+00 : f32
    %177 = vector.broadcast %cst_60 : f32 to vector<8x64xf32>
    %178 = arith.mulf %177, %176 : vector<8x64xf32>
    %179 = arith.negf %178 : vector<8x64xf32>
    %180 = math.exp %179 : vector<8x64xf32>
    %cst_61 = arith.constant 1.000000e+00 : f32
    %181 = vector.broadcast %cst_61 : f32 to vector<8x64xf32>
    %182 = arith.addf %181, %180 : vector<8x64xf32>
    %183 = arith.divf %181, %182 : vector<8x64xf32>
    %cst_62 = arith.constant 2.000000e+00 : f32
    %184 = vector.broadcast %cst_62 : f32 to vector<8x64xf32>
    %185 = arith.mulf %184, %183 : vector<8x64xf32>
    %cst_63 = arith.constant 1.000000e+00 : f32
    %186 = vector.broadcast %cst_63 : f32 to vector<8x64xf32>
    %187 = arith.subf %185, %186 : vector<8x64xf32>
    %188 = arith.mulf %173, %187 : vector<8x64xf32>
    %189 = vector.extract_strided_slice %21 {offsets = [5, 0, 0], sizes = [1, 8, 256], strides = [1, 1, 1]} : vector<8x8x256xf32> to vector<1x8x256xf32>
    %190 = vector.shape_cast %189 : vector<1x8x256xf32> to vector<8x256xf32>
    %191 = arith.truncf %188 : vector<8x64xf32> to vector<8x64xbf16>
    %cst_64 = arith.constant dense<0.000000e+00> : vector<8x256xf32>
    %192 = tpu.matmul %191, %1, %cst_64 {dimension_numbers = #tpu.dot_dimension_numbers<[1], [0], [0], [1], [0, 0, 1, 1], [], []>} : vector<8x64xbf16>, vector<64x256xbf16>, vector<8x256xf32> -> vector<8x256xf32>
    %193 = arith.addf %190, %192 : vector<8x256xf32>
    %194 = arith.negf %193 : vector<8x256xf32>
    %195 = math.exp %194 : vector<8x256xf32>
    %cst_65 = arith.constant 1.000000e+00 : f32
    %196 = vector.broadcast %cst_65 : f32 to vector<8x256xf32>
    %197 = arith.addf %196, %195 : vector<8x256xf32>
    %198 = arith.divf %196, %197 : vector<8x256xf32>
    %199 = vector.extract_strided_slice %198 {offsets = [0, 0], sizes = [8, 64], strides = [1, 1]} : vector<8x256xf32> to vector<8x64xf32>
    %200 = vector.extract_strided_slice %198 {offsets = [0, 64], sizes = [8, 64], strides = [1, 1]} : vector<8x256xf32> to vector<8x64xf32>
    %201 = vector.extract_strided_slice %198 {offsets = [0, 128], sizes = [8, 64], strides = [1, 1]} : vector<8x256xf32> to vector<8x64xf32>
    %cst_66 = arith.constant 2.000000e+00 : f32
    %202 = vector.broadcast %cst_66 : f32 to vector<8x64xf32>
    %203 = arith.mulf %202, %201 : vector<8x64xf32>
    %cst_67 = arith.constant 1.000000e+00 : f32
    %204 = vector.broadcast %cst_67 : f32 to vector<8x64xf32>
    %205 = arith.subf %203, %204 : vector<8x64xf32>
    %206 = vector.extract_strided_slice %198 {offsets = [0, 192], sizes = [8, 64], strides = [1, 1]} : vector<8x256xf32> to vector<8x64xf32>
    %207 = arith.mulf %200, %176 : vector<8x64xf32>
    %208 = arith.mulf %199, %205 : vector<8x64xf32>
    %209 = arith.addf %207, %208 : vector<8x64xf32>
    %cst_68 = arith.constant 2.000000e+00 : f32
    %210 = vector.broadcast %cst_68 : f32 to vector<8x64xf32>
    %211 = arith.mulf %210, %209 : vector<8x64xf32>
    %212 = arith.negf %211 : vector<8x64xf32>
    %213 = math.exp %212 : vector<8x64xf32>
    %cst_69 = arith.constant 1.000000e+00 : f32
    %214 = vector.broadcast %cst_69 : f32 to vector<8x64xf32>
    %215 = arith.addf %214, %213 : vector<8x64xf32>
    %216 = arith.divf %214, %215 : vector<8x64xf32>
    %cst_70 = arith.constant 2.000000e+00 : f32
    %217 = vector.broadcast %cst_70 : f32 to vector<8x64xf32>
    %218 = arith.mulf %217, %216 : vector<8x64xf32>
    %cst_71 = arith.constant 1.000000e+00 : f32
    %219 = vector.broadcast %cst_71 : f32 to vector<8x64xf32>
    %220 = arith.subf %218, %219 : vector<8x64xf32>
    %221 = arith.mulf %206, %220 : vector<8x64xf32>
    %222 = vector.extract_strided_slice %21 {offsets = [6, 0, 0], sizes = [1, 8, 256], strides = [1, 1, 1]} : vector<8x8x256xf32> to vector<1x8x256xf32>
    %223 = vector.shape_cast %222 : vector<1x8x256xf32> to vector<8x256xf32>
    %224 = arith.truncf %221 : vector<8x64xf32> to vector<8x64xbf16>
    %cst_72 = arith.constant dense<0.000000e+00> : vector<8x256xf32>
    %225 = tpu.matmul %224, %1, %cst_72 {dimension_numbers = #tpu.dot_dimension_numbers<[1], [0], [0], [1], [0, 0, 1, 1], [], []>} : vector<8x64xbf16>, vector<64x256xbf16>, vector<8x256xf32> -> vector<8x256xf32>
    %226 = arith.addf %223, %225 : vector<8x256xf32>
    %227 = arith.negf %226 : vector<8x256xf32>
    %228 = math.exp %227 : vector<8x256xf32>
    %cst_73 = arith.constant 1.000000e+00 : f32
    %229 = vector.broadcast %cst_73 : f32 to vector<8x256xf32>
    %230 = arith.addf %229, %228 : vector<8x256xf32>
    %231 = arith.divf %229, %230 : vector<8x256xf32>
    %232 = vector.extract_strided_slice %231 {offsets = [0, 0], sizes = [8, 64], strides = [1, 1]} : vector<8x256xf32> to vector<8x64xf32>
    %233 = vector.extract_strided_slice %231 {offsets = [0, 64], sizes = [8, 64], strides = [1, 1]} : vector<8x256xf32> to vector<8x64xf32>
    %234 = vector.extract_strided_slice %231 {offsets = [0, 128], sizes = [8, 64], strides = [1, 1]} : vector<8x256xf32> to vector<8x64xf32>
    %cst_74 = arith.constant 2.000000e+00 : f32
    %235 = vector.broadcast %cst_74 : f32 to vector<8x64xf32>
    %236 = arith.mulf %235, %234 : vector<8x64xf32>
    %cst_75 = arith.constant 1.000000e+00 : f32
    %237 = vector.broadcast %cst_75 : f32 to vector<8x64xf32>
    %238 = arith.subf %236, %237 : vector<8x64xf32>
    %239 = vector.extract_strided_slice %231 {offsets = [0, 192], sizes = [8, 64], strides = [1, 1]} : vector<8x256xf32> to vector<8x64xf32>
    %240 = arith.mulf %233, %209 : vector<8x64xf32>
    %241 = arith.mulf %232, %238 : vector<8x64xf32>
    %242 = arith.addf %240, %241 : vector<8x64xf32>
    %cst_76 = arith.constant 2.000000e+00 : f32
    %243 = vector.broadcast %cst_76 : f32 to vector<8x64xf32>
    %244 = arith.mulf %243, %242 : vector<8x64xf32>
    %245 = arith.negf %244 : vector<8x64xf32>
    %246 = math.exp %245 : vector<8x64xf32>
    %cst_77 = arith.constant 1.000000e+00 : f32
    %247 = vector.broadcast %cst_77 : f32 to vector<8x64xf32>
    %248 = arith.addf %247, %246 : vector<8x64xf32>
    %249 = arith.divf %247, %248 : vector<8x64xf32>
    %cst_78 = arith.constant 2.000000e+00 : f32
    %250 = vector.broadcast %cst_78 : f32 to vector<8x64xf32>
    %251 = arith.mulf %250, %249 : vector<8x64xf32>
    %cst_79 = arith.constant 1.000000e+00 : f32
    %252 = vector.broadcast %cst_79 : f32 to vector<8x64xf32>
    %253 = arith.subf %251, %252 : vector<8x64xf32>
    %254 = arith.mulf %239, %253 : vector<8x64xf32>
    %255 = vector.extract_strided_slice %21 {offsets = [7, 0, 0], sizes = [1, 8, 256], strides = [1, 1, 1]} : vector<8x8x256xf32> to vector<1x8x256xf32>
    %256 = vector.shape_cast %255 : vector<1x8x256xf32> to vector<8x256xf32>
    %257 = arith.truncf %254 : vector<8x64xf32> to vector<8x64xbf16>
    %cst_80 = arith.constant dense<0.000000e+00> : vector<8x256xf32>
    %258 = tpu.matmul %257, %1, %cst_80 {dimension_numbers = #tpu.dot_dimension_numbers<[1], [0], [0], [1], [0, 0, 1, 1], [], []>} : vector<8x64xbf16>, vector<64x256xbf16>, vector<8x256xf32> -> vector<8x256xf32>
    %259 = arith.addf %256, %258 : vector<8x256xf32>
    %260 = arith.negf %259 : vector<8x256xf32>
    %261 = math.exp %260 : vector<8x256xf32>
    %cst_81 = arith.constant 1.000000e+00 : f32
    %262 = vector.broadcast %cst_81 : f32 to vector<8x256xf32>
    %263 = arith.addf %262, %261 : vector<8x256xf32>
    %264 = arith.divf %262, %263 : vector<8x256xf32>
    %265 = vector.extract_strided_slice %264 {offsets = [0, 0], sizes = [8, 64], strides = [1, 1]} : vector<8x256xf32> to vector<8x64xf32>
    %266 = vector.extract_strided_slice %264 {offsets = [0, 64], sizes = [8, 64], strides = [1, 1]} : vector<8x256xf32> to vector<8x64xf32>
    %267 = vector.extract_strided_slice %264 {offsets = [0, 128], sizes = [8, 64], strides = [1, 1]} : vector<8x256xf32> to vector<8x64xf32>
    %cst_82 = arith.constant 2.000000e+00 : f32
    %268 = vector.broadcast %cst_82 : f32 to vector<8x64xf32>
    %269 = arith.mulf %268, %267 : vector<8x64xf32>
    %cst_83 = arith.constant 1.000000e+00 : f32
    %270 = vector.broadcast %cst_83 : f32 to vector<8x64xf32>
    %271 = arith.subf %269, %270 : vector<8x64xf32>
    %272 = vector.extract_strided_slice %264 {offsets = [0, 192], sizes = [8, 64], strides = [1, 1]} : vector<8x256xf32> to vector<8x64xf32>
    %273 = arith.mulf %266, %242 : vector<8x64xf32>
    %274 = arith.mulf %265, %271 : vector<8x64xf32>
    %275 = arith.addf %273, %274 : vector<8x64xf32>
    %cst_84 = arith.constant 2.000000e+00 : f32
    %276 = vector.broadcast %cst_84 : f32 to vector<8x64xf32>
    %277 = arith.mulf %276, %275 : vector<8x64xf32>
    %278 = arith.negf %277 : vector<8x64xf32>
    %279 = math.exp %278 : vector<8x64xf32>
    %cst_85 = arith.constant 1.000000e+00 : f32
    %280 = vector.broadcast %cst_85 : f32 to vector<8x64xf32>
    %281 = arith.addf %280, %279 : vector<8x64xf32>
    %282 = arith.divf %280, %281 : vector<8x64xf32>
    %cst_86 = arith.constant 2.000000e+00 : f32
    %283 = vector.broadcast %cst_86 : f32 to vector<8x64xf32>
    %284 = arith.mulf %283, %282 : vector<8x64xf32>
    %cst_87 = arith.constant 1.000000e+00 : f32
    %285 = vector.broadcast %cst_87 : f32 to vector<8x64xf32>
    %286 = arith.subf %284, %285 : vector<8x64xf32>
    %287 = arith.mulf %272, %286 : vector<8x64xf32>
    %288 = vector.extract_strided_slice %287 {offsets = [0, 0], sizes = [8, 32], strides = [1, 1]} : vector<8x64xf32> to vector<8x32xf32>
    %289 = vector.extract_strided_slice %287 {offsets = [0, 32], sizes = [8, 32], strides = [1, 1]} : vector<8x64xf32> to vector<8x32xf32>
    %290 = vector.extract_strided_slice %275 {offsets = [0, 0], sizes = [8, 32], strides = [1, 1]} : vector<8x64xf32> to vector<8x32xf32>
    %291 = vector.extract_strided_slice %275 {offsets = [0, 32], sizes = [8, 32], strides = [1, 1]} : vector<8x64xf32> to vector<8x32xf32>
    %292 = arith.addf %288, %289 : vector<8x32xf32>
    %293 = tpu.concatenate %292, %288 in 1 : vector<8x32xf32>, vector<8x32xf32> -> vector<8x64xf32>
    %294 = arith.addf %290, %291 : vector<8x32xf32>
    %295 = tpu.concatenate %294, %290 in 1 : vector<8x32xf32>, vector<8x32xf32> -> vector<8x64xf32>
    %296 = vector.extract_strided_slice %9 {offsets = [7, 0, 0], sizes = [1, 8, 2], strides = [1, 1, 1]} : vector<8x8x2xf32> to vector<1x8x2xf32>
    %297 = vector.shape_cast %296 : vector<1x8x2xf32> to vector<8x2xf32>
    %298 = arith.truncf %297 : vector<8x2xf32> to vector<8x2xbf16>
    %299 = vector.extract_strided_slice %3 {offsets = [0, 0], sizes = [2, 256], strides = [1, 1]} : vector<4x256xbf16> to vector<2x256xbf16>
    %cst_88 = arith.constant dense<0.000000e+00> : vector<8x256xf32>
    %300 = tpu.matmul %298, %299, %cst_88 {dimension_numbers = #tpu.dot_dimension_numbers<[1], [0], [0], [1], [0, 0, 1, 1], [], []>} : vector<8x2xbf16>, vector<2x256xbf16>, vector<8x256xf32> -> vector<8x256xf32>
    %301 = vector.extract_strided_slice %8 {offsets = [7, 0, 0], sizes = [1, 8, 2], strides = [1, 1, 1]} : vector<8x8x2xf32> to vector<1x8x2xf32>
    %302 = vector.shape_cast %301 : vector<1x8x2xf32> to vector<8x2xf32>
    %303 = arith.truncf %302 : vector<8x2xf32> to vector<8x2xbf16>
    %304 = vector.extract_strided_slice %3 {offsets = [2, 0], sizes = [2, 256], strides = [1, 1]} : vector<4x256xbf16> to vector<2x256xbf16>
    %cst_89 = arith.constant dense<0.000000e+00> : vector<8x256xf32>
    %305 = tpu.matmul %303, %304, %cst_89 {dimension_numbers = #tpu.dot_dimension_numbers<[1], [0], [0], [1], [0, 0, 1, 1], [], []>} : vector<8x2xbf16>, vector<2x256xbf16>, vector<8x256xf32> -> vector<8x256xf32>
    %306 = arith.addf %300, %305 : vector<8x256xf32>
    %307 = vector.broadcast %5 : vector<1x256xf32> to vector<8x256xf32>
    %308 = arith.addf %306, %307 : vector<8x256xf32>
    %309 = arith.truncf %293 : vector<8x64xf32> to vector<8x64xbf16>
    %cst_90 = arith.constant dense<0.000000e+00> : vector<8x256xf32>
    %310 = tpu.matmul %309, %4, %cst_90 {dimension_numbers = #tpu.dot_dimension_numbers<[1], [0], [0], [1], [0, 0, 1, 1], [], []>} : vector<8x64xbf16>, vector<64x256xbf16>, vector<8x256xf32> -> vector<8x256xf32>
    %311 = arith.addf %308, %310 : vector<8x256xf32>
    %312 = arith.negf %311 : vector<8x256xf32>
    %313 = math.exp %312 : vector<8x256xf32>
    %cst_91 = arith.constant 1.000000e+00 : f32
    %314 = vector.broadcast %cst_91 : f32 to vector<8x256xf32>
    %315 = arith.addf %314, %313 : vector<8x256xf32>
    %316 = arith.divf %314, %315 : vector<8x256xf32>
    %317 = vector.extract_strided_slice %316 {offsets = [0, 0], sizes = [8, 64], strides = [1, 1]} : vector<8x256xf32> to vector<8x64xf32>
    %318 = vector.extract_strided_slice %316 {offsets = [0, 64], sizes = [8, 64], strides = [1, 1]} : vector<8x256xf32> to vector<8x64xf32>
    %319 = vector.extract_strided_slice %316 {offsets = [0, 128], sizes = [8, 64], strides = [1, 1]} : vector<8x256xf32> to vector<8x64xf32>
    %cst_92 = arith.constant 2.000000e+00 : f32
    %320 = vector.broadcast %cst_92 : f32 to vector<8x64xf32>
    %321 = arith.mulf %320, %319 : vector<8x64xf32>
    %cst_93 = arith.constant 1.000000e+00 : f32
    %322 = vector.broadcast %cst_93 : f32 to vector<8x64xf32>
    %323 = arith.subf %321, %322 : vector<8x64xf32>
    %324 = vector.extract_strided_slice %316 {offsets = [0, 192], sizes = [8, 64], strides = [1, 1]} : vector<8x256xf32> to vector<8x64xf32>
    %325 = arith.mulf %318, %295 : vector<8x64xf32>
    %326 = arith.mulf %317, %323 : vector<8x64xf32>
    %327 = arith.addf %325, %326 : vector<8x64xf32>
    %cst_94 = arith.constant 2.000000e+00 : f32
    %328 = vector.broadcast %cst_94 : f32 to vector<8x64xf32>
    %329 = arith.mulf %328, %327 : vector<8x64xf32>
    %330 = arith.negf %329 : vector<8x64xf32>
    %331 = math.exp %330 : vector<8x64xf32>
    %cst_95 = arith.constant 1.000000e+00 : f32
    %332 = vector.broadcast %cst_95 : f32 to vector<8x64xf32>
    %333 = arith.addf %332, %331 : vector<8x64xf32>
    %334 = arith.divf %332, %333 : vector<8x64xf32>
    %cst_96 = arith.constant 2.000000e+00 : f32
    %335 = vector.broadcast %cst_96 : f32 to vector<8x64xf32>
    %336 = arith.mulf %335, %334 : vector<8x64xf32>
    %cst_97 = arith.constant 1.000000e+00 : f32
    %337 = vector.broadcast %cst_97 : f32 to vector<8x64xf32>
    %338 = arith.subf %336, %337 : vector<8x64xf32>
    %339 = arith.mulf %324, %338 : vector<8x64xf32>
    %340 = arith.truncf %339 : vector<8x64xf32> to vector<8x64xbf16>
    %cst_98 = arith.constant dense<0.000000e+00> : vector<8x256xf32>
    %341 = tpu.matmul %340, %4, %cst_98 {dimension_numbers = #tpu.dot_dimension_numbers<[1], [0], [0], [1], [0, 0, 1, 1], [], []>} : vector<8x64xbf16>, vector<64x256xbf16>, vector<8x256xf32> -> vector<8x256xf32>
    %342 = arith.addf %308, %341 : vector<8x256xf32>
    %343 = arith.negf %342 : vector<8x256xf32>
    %344 = math.exp %343 : vector<8x256xf32>
    %cst_99 = arith.constant 1.000000e+00 : f32
    %345 = vector.broadcast %cst_99 : f32 to vector<8x256xf32>
    %346 = arith.addf %345, %344 : vector<8x256xf32>
    %347 = arith.divf %345, %346 : vector<8x256xf32>
    %348 = vector.extract_strided_slice %347 {offsets = [0, 0], sizes = [8, 64], strides = [1, 1]} : vector<8x256xf32> to vector<8x64xf32>
    %349 = vector.extract_strided_slice %347 {offsets = [0, 64], sizes = [8, 64], strides = [1, 1]} : vector<8x256xf32> to vector<8x64xf32>
    %350 = vector.extract_strided_slice %347 {offsets = [0, 128], sizes = [8, 64], strides = [1, 1]} : vector<8x256xf32> to vector<8x64xf32>
    %cst_100 = arith.constant 2.000000e+00 : f32
    %351 = vector.broadcast %cst_100 : f32 to vector<8x64xf32>
    %352 = arith.mulf %351, %350 : vector<8x64xf32>
    %cst_101 = arith.constant 1.000000e+00 : f32
    %353 = vector.broadcast %cst_101 : f32 to vector<8x64xf32>
    %354 = arith.subf %352, %353 : vector<8x64xf32>
    %355 = vector.extract_strided_slice %347 {offsets = [0, 192], sizes = [8, 64], strides = [1, 1]} : vector<8x256xf32> to vector<8x64xf32>
    %356 = arith.mulf %349, %327 : vector<8x64xf32>
    %357 = arith.mulf %348, %354 : vector<8x64xf32>
    %358 = arith.addf %356, %357 : vector<8x64xf32>
    %cst_102 = arith.constant 2.000000e+00 : f32
    %359 = vector.broadcast %cst_102 : f32 to vector<8x64xf32>
    %360 = arith.mulf %359, %358 : vector<8x64xf32>
    %361 = arith.negf %360 : vector<8x64xf32>
    %362 = math.exp %361 : vector<8x64xf32>
    %cst_103 = arith.constant 1.000000e+00 : f32
    %363 = vector.broadcast %cst_103 : f32 to vector<8x64xf32>
    %364 = arith.addf %363, %362 : vector<8x64xf32>
    %365 = arith.divf %363, %364 : vector<8x64xf32>
    %cst_104 = arith.constant 2.000000e+00 : f32
    %366 = vector.broadcast %cst_104 : f32 to vector<8x64xf32>
    %367 = arith.mulf %366, %365 : vector<8x64xf32>
    %cst_105 = arith.constant 1.000000e+00 : f32
    %368 = vector.broadcast %cst_105 : f32 to vector<8x64xf32>
    %369 = arith.subf %367, %368 : vector<8x64xf32>
    %370 = arith.mulf %355, %369 : vector<8x64xf32>
    %371 = arith.truncf %370 : vector<8x64xf32> to vector<8x64xbf16>
    %cst_106 = arith.constant dense<0.000000e+00> : vector<8x256xf32>
    %372 = tpu.matmul %371, %4, %cst_106 {dimension_numbers = #tpu.dot_dimension_numbers<[1], [0], [0], [1], [0, 0, 1, 1], [], []>} : vector<8x64xbf16>, vector<64x256xbf16>, vector<8x256xf32> -> vector<8x256xf32>
    %373 = arith.addf %308, %372 : vector<8x256xf32>
    %374 = arith.negf %373 : vector<8x256xf32>
    %375 = math.exp %374 : vector<8x256xf32>
    %cst_107 = arith.constant 1.000000e+00 : f32
    %376 = vector.broadcast %cst_107 : f32 to vector<8x256xf32>
    %377 = arith.addf %376, %375 : vector<8x256xf32>
    %378 = arith.divf %376, %377 : vector<8x256xf32>
    %379 = vector.extract_strided_slice %378 {offsets = [0, 0], sizes = [8, 64], strides = [1, 1]} : vector<8x256xf32> to vector<8x64xf32>
    %380 = vector.extract_strided_slice %378 {offsets = [0, 64], sizes = [8, 64], strides = [1, 1]} : vector<8x256xf32> to vector<8x64xf32>
    %381 = vector.extract_strided_slice %378 {offsets = [0, 128], sizes = [8, 64], strides = [1, 1]} : vector<8x256xf32> to vector<8x64xf32>
    %cst_108 = arith.constant 2.000000e+00 : f32
    %382 = vector.broadcast %cst_108 : f32 to vector<8x64xf32>
    %383 = arith.mulf %382, %381 : vector<8x64xf32>
    %cst_109 = arith.constant 1.000000e+00 : f32
    %384 = vector.broadcast %cst_109 : f32 to vector<8x64xf32>
    %385 = arith.subf %383, %384 : vector<8x64xf32>
    %386 = vector.extract_strided_slice %378 {offsets = [0, 192], sizes = [8, 64], strides = [1, 1]} : vector<8x256xf32> to vector<8x64xf32>
    %387 = arith.mulf %380, %358 : vector<8x64xf32>
    %388 = arith.mulf %379, %385 : vector<8x64xf32>
    %389 = arith.addf %387, %388 : vector<8x64xf32>
    %cst_110 = arith.constant 2.000000e+00 : f32
    %390 = vector.broadcast %cst_110 : f32 to vector<8x64xf32>
    %391 = arith.mulf %390, %389 : vector<8x64xf32>
    %392 = arith.negf %391 : vector<8x64xf32>
    %393 = math.exp %392 : vector<8x64xf32>
    %cst_111 = arith.constant 1.000000e+00 : f32
    %394 = vector.broadcast %cst_111 : f32 to vector<8x64xf32>
    %395 = arith.addf %394, %393 : vector<8x64xf32>
    %396 = arith.divf %394, %395 : vector<8x64xf32>
    %cst_112 = arith.constant 2.000000e+00 : f32
    %397 = vector.broadcast %cst_112 : f32 to vector<8x64xf32>
    %398 = arith.mulf %397, %396 : vector<8x64xf32>
    %cst_113 = arith.constant 1.000000e+00 : f32
    %399 = vector.broadcast %cst_113 : f32 to vector<8x64xf32>
    %400 = arith.subf %398, %399 : vector<8x64xf32>
    %401 = arith.mulf %386, %400 : vector<8x64xf32>
    %402 = arith.truncf %401 : vector<8x64xf32> to vector<8x64xbf16>
    %cst_114 = arith.constant dense<0.000000e+00> : vector<8x256xf32>
    %403 = tpu.matmul %402, %4, %cst_114 {dimension_numbers = #tpu.dot_dimension_numbers<[1], [0], [0], [1], [0, 0, 1, 1], [], []>} : vector<8x64xbf16>, vector<64x256xbf16>, vector<8x256xf32> -> vector<8x256xf32>
    %404 = arith.addf %308, %403 : vector<8x256xf32>
    %405 = arith.negf %404 : vector<8x256xf32>
    %406 = math.exp %405 : vector<8x256xf32>
    %cst_115 = arith.constant 1.000000e+00 : f32
    %407 = vector.broadcast %cst_115 : f32 to vector<8x256xf32>
    %408 = arith.addf %407, %406 : vector<8x256xf32>
    %409 = arith.divf %407, %408 : vector<8x256xf32>
    %410 = vector.extract_strided_slice %409 {offsets = [0, 0], sizes = [8, 64], strides = [1, 1]} : vector<8x256xf32> to vector<8x64xf32>
    %411 = vector.extract_strided_slice %409 {offsets = [0, 64], sizes = [8, 64], strides = [1, 1]} : vector<8x256xf32> to vector<8x64xf32>
    %412 = vector.extract_strided_slice %409 {offsets = [0, 128], sizes = [8, 64], strides = [1, 1]} : vector<8x256xf32> to vector<8x64xf32>
    %cst_116 = arith.constant 2.000000e+00 : f32
    %413 = vector.broadcast %cst_116 : f32 to vector<8x64xf32>
    %414 = arith.mulf %413, %412 : vector<8x64xf32>
    %cst_117 = arith.constant 1.000000e+00 : f32
    %415 = vector.broadcast %cst_117 : f32 to vector<8x64xf32>
    %416 = arith.subf %414, %415 : vector<8x64xf32>
    %417 = vector.extract_strided_slice %409 {offsets = [0, 192], sizes = [8, 64], strides = [1, 1]} : vector<8x256xf32> to vector<8x64xf32>
    %418 = arith.mulf %411, %389 : vector<8x64xf32>
    %419 = arith.mulf %410, %416 : vector<8x64xf32>
    %420 = arith.addf %418, %419 : vector<8x64xf32>
    %cst_118 = arith.constant 2.000000e+00 : f32
    %421 = vector.broadcast %cst_118 : f32 to vector<8x64xf32>
    %422 = arith.mulf %421, %420 : vector<8x64xf32>
    %423 = arith.negf %422 : vector<8x64xf32>
    %424 = math.exp %423 : vector<8x64xf32>
    %cst_119 = arith.constant 1.000000e+00 : f32
    %425 = vector.broadcast %cst_119 : f32 to vector<8x64xf32>
    %426 = arith.addf %425, %424 : vector<8x64xf32>
    %427 = arith.divf %425, %426 : vector<8x64xf32>
    %cst_120 = arith.constant 2.000000e+00 : f32
    %428 = vector.broadcast %cst_120 : f32 to vector<8x64xf32>
    %429 = arith.mulf %428, %427 : vector<8x64xf32>
    %cst_121 = arith.constant 1.000000e+00 : f32
    %430 = vector.broadcast %cst_121 : f32 to vector<8x64xf32>
    %431 = arith.subf %429, %430 : vector<8x64xf32>
    %432 = arith.mulf %417, %431 : vector<8x64xf32>
    %433 = tpu.concatenate %339, %370, %401, %432 in 0 : vector<8x64xf32>, vector<8x64xf32>, vector<8x64xf32>, vector<8x64xf32> -> vector<32x64xf32>
    %434 = arith.truncf %433 : vector<32x64xf32> to vector<32x64xbf16>
    %cst_122 = arith.constant dense<0.000000e+00> : vector<32x4xf32>
    %435 = tpu.matmul %434, %6, %cst_122 {dimension_numbers = #tpu.dot_dimension_numbers<[1], [0], [0], [1], [0, 0, 1, 1], [], []>} : vector<32x64xbf16>, vector<64x4xbf16>, vector<32x4xf32> -> vector<32x4xf32>
    %436 = vector.broadcast %7 : vector<1x4xf32> to vector<32x4xf32>
    %437 = arith.addf %435, %436 : vector<32x4xf32>
    %438 = vector.shape_cast %437 : vector<32x4xf32> to vector<4x8x4xf32>
    %439 = vector.extract_strided_slice %438 {offsets = [0, 0, 0], sizes = [4, 8, 2], strides = [1, 1, 1]} : vector<4x8x4xf32> to vector<4x8x2xf32>
    %c0_123 = arith.constant 0 : index
    %c0_124 = arith.constant 0 : index
    %c0_125 = arith.constant 0 : index
    %440 = vector.load %arg12[%c0_123, %c0_124, %c0_125] : memref<4x8x2xf32, #tpu.memory_space<vmem>>, vector<4x8x2xf32>
    tpu.vector_store %arg12[%c0_123, %c0_124, %c0_125], %439 {strides = array<i32>} : memref<4x8x2xf32, #tpu.memory_space<vmem>>, vector<4x8x2xf32>,
    %441 = vector.extract_strided_slice %438 {offsets = [0, 0, 2], sizes = [4, 8, 2], strides = [1, 1, 1]} : vector<4x8x4xf32> to vector<4x8x2xf32>
    %c0_126 = arith.constant 0 : index
    %c0_127 = arith.constant 0 : index
    %c0_128 = arith.constant 0 : index
    %442 = vector.load %arg11[%c0_126, %c0_127, %c0_128] : memref<4x8x2xf32, #tpu.memory_space<vmem>>, vector<4x8x2xf32>
    tpu.vector_store %arg11[%c0_126, %c0_127, %c0_128], %441 {strides = array<i32>} : memref<4x8x2xf32, #tpu.memory_space<vmem>>, vector<4x8x2xf32>,
    return
  }
  func.func @transform_0(%arg0: i32) -> (i32, i32, i32) {
    %c0_i32 = arith.constant 0 : i32
    %c0_i32_0 = arith.constant 0 : i32
    %c0_i32_1 = arith.constant 0 : i32
    return %c0_i32, %arg0, %c0_i32_0 : i32, i32, i32
  }
  func.func @transform_1(%arg0: i32) -> (i32, i32, i32) {
    %c0_i32 = arith.constant 0 : i32
    %c0_i32_0 = arith.constant 0 : i32
    %c0_i32_1 = arith.constant 0 : i32
    return %c0_i32, %arg0, %c0_i32_0 : i32, i32, i32
  }
  func.func @transform_2(%arg0: i32) -> (i32, i32) {
    %c0_i32 = arith.constant 0 : i32
    %c0_i32_0 = arith.constant 0 : i32
    %c0_i32_1 = arith.constant 0 : i32
    return %c0_i32, %c0_i32_0 : i32, i32
  }
  func.func @transform_3(%arg0: i32) -> (i32, i32) {
    %c0_i32 = arith.constant 0 : i32
    %c0_i32_0 = arith.constant 0 : i32
    %c0_i32_1 = arith.constant 0 : i32
    return %c0_i32, %c0_i32_0 : i32, i32
  }
  func.func @transform_4(%arg0: i32) -> (i32, i32) {
    %c0_i32 = arith.constant 0 : i32
    %c0_i32_0 = arith.constant 0 : i32
    %c0_i32_1 = arith.constant 0 : i32
    return %c0_i32, %c0_i32_0 : i32, i32
  }
  func.func @transform_5(%arg0: i32) -> (i32, i32) {
    %c0_i32 = arith.constant 0 : i32
    %c0_i32_0 = arith.constant 0 : i32
    %c0_i32_1 = arith.constant 0 : i32
    return %c0_i32, %c0_i32_0 : i32, i32
  }
  func.func @transform_6(%arg0: i32) -> (i32, i32) {
    %c0_i32 = arith.constant 0 : i32
    %c0_i32_0 = arith.constant 0 : i32
    %c0_i32_1 = arith.constant 0 : i32
    return %c0_i32, %c0_i32_0 : i32, i32
  }
  func.func @transform_7(%arg0: i32) -> (i32, i32) {
    %c0_i32 = arith.constant 0 : i32
    %c0_i32_0 = arith.constant 0 : i32
    %c0_i32_1 = arith.constant 0 : i32
    return %c0_i32, %c0_i32_0 : i32, i32
  }
  func.func @transform_8(%arg0: i32) -> (i32, i32) {
    %c0_i32 = arith.constant 0 : i32
    %c0_i32_0 = arith.constant 0 : i32
    %c0_i32_1 = arith.constant 0 : i32
    return %c0_i32, %c0_i32_0 : i32, i32
  }
  func.func @transform_9(%arg0: i32) -> (i32, i32) {
    %c0_i32 = arith.constant 0 : i32
    %c0_i32_0 = arith.constant 0 : i32
    %c0_i32_1 = arith.constant 0 : i32
    return %c0_i32, %c0_i32_0 : i32, i32
  }
  func.func @transform_10(%arg0: i32) -> (i32, i32, i32) {
    %c0_i32 = arith.constant 0 : i32
    %c0_i32_0 = arith.constant 0 : i32
    %c0_i32_1 = arith.constant 0 : i32
    return %c0_i32, %arg0, %c0_i32_0 : i32, i32, i32
  }
  func.func @transform_11(%arg0: i32) -> (i32, i32, i32) {
    %c0_i32 = arith.constant 0 : i32
    %c0_i32_0 = arith.constant 0 : i32
    %c0_i32_1 = arith.constant 0 : i32
    return %c0_i32, %arg0, %c0_i32_0 : i32, i32, i32
  }
}

</mosaic_0001>

<llo_original>
// kernel: tpu_custom_call.1
$region0: #{tpu_custom_call.1}
  #allocation0 [shape = 'u32[]', space=smem, size = 0x4, offset = 0x4, fixed_abs, tag = 'smem constant byte address 0x4 - core index']
  #allocation1 [shape = 'u32[144,128]{1,0:T(1,128)}', space=vmem, size = 0x12000, scoped, tag = 'internal scratch']
  %s0 = inlined_call_operand.vmem [shape: f32[8,8,2], index: 0, kind: input, shape index: {}]
  %s1 = inlined_call_operand.vmem [shape: f32[8,8,2], index: 1, kind: input, shape index: {}]
  %s2 = inlined_call_operand.vmem [shape: bf16[4,256], index: 2, kind: input, shape index: {}]
  %s3 = inlined_call_operand.vmem [shape: bf16[64,256], index: 3, kind: input, shape index: {}]
  %s4 = inlined_call_operand.vmem [shape: f32[1,256], index: 4, kind: input, shape index: {}]
  %s5 = inlined_call_operand.vmem [shape: bf16[4,256], index: 5, kind: input, shape index: {}]
  %s6 = inlined_call_operand.vmem [shape: bf16[64,256], index: 6, kind: input, shape index: {}]
  %s7 = inlined_call_operand.vmem [shape: f32[1,256], index: 7, kind: input, shape index: {}]
  %s8 = inlined_call_operand.vmem [shape: bf16[64,4], index: 8, kind: input, shape index: {}]
  %s9 = inlined_call_operand.vmem [shape: f32[1,4], index: 9, kind: input, shape index: {}]
  %s10 = inlined_call_operand.vmem [shape: f32[4,8,2], index: 10, kind: output, shape index: {0}]
  %s11 = inlined_call_operand.vmem [shape: f32[4,8,2], index: 11, kind: output, shape index: {1}]
  %12 = xla_tuple %s10, %s11
  %s13 = sld [smem:[#allocation0]]
  $region58: #{tpu_custom_call.1} parent=0
    _
  %s15 = ssub.s32 1, %s13
  %s16 = scalar_select 0, %s15, %s13
  // Predicated region
  $region2: #{tpu_custom_call.1} parent=0 // pred_check
    _
  $region3: #{tpu_custom_call.1} parent=0 // pred_check_branch
    %18 = sbr.rel (0) target = $region5
  $region4: #{tpu_custom_call.1} parent=0 // pred_region
    _
  $region5: #{tpu_custom_call.1} parent=0 // pred_fallthru
    _
  // Predicated region
  $region6: #{tpu_custom_call.1} parent=0 // pred_check
    _
  $region7: #{tpu_custom_call.1} parent=0 // pred_check_branch
    %20 = sbr.rel (0) target = $region9
  $region8: #{tpu_custom_call.1} parent=0 // pred_region
    _
  $region9: #{tpu_custom_call.1} parent=0 // pred_fallthru
    _
  // Predicated region
  $region10: #{tpu_custom_call.1} parent=0 // pred_check
    _
  $region11: #{tpu_custom_call.1} parent=0 // pred_check_branch
    %22 = sbr.rel (0) target = $region13
  $region12: #{tpu_custom_call.1} parent=0 // pred_region
    _
  $region13: #{tpu_custom_call.1} parent=0 // pred_fallthru
    _
  // Predicated region
  $region14: #{tpu_custom_call.1} parent=0 // pred_check
    _
  $region15: #{tpu_custom_call.1} parent=0 // pred_check_branch
    %24 = sbr.rel (0) target = $region17
  $region16: #{tpu_custom_call.1} parent=0 // pred_region
    _
  $region17: #{tpu_custom_call.1} parent=0 // pred_fallthru
    _
  // Predicated region
  $region18: #{tpu_custom_call.1} parent=0 // pred_check
    _
  $region19: #{tpu_custom_call.1} parent=0 // pred_check_branch
    %26 = sbr.rel (0) target = $region21
  $region20: #{tpu_custom_call.1} parent=0 // pred_region
    _
  $region21: #{tpu_custom_call.1} parent=0 // pred_fallthru
    _
  // Predicated region
  $region22: #{tpu_custom_call.1} parent=0 // pred_check
    _
  $region23: #{tpu_custom_call.1} parent=0 // pred_check_branch
    %28 = sbr.rel (0) target = $region25
  $region24: #{tpu_custom_call.1} parent=0 // pred_region
    _
  $region25: #{tpu_custom_call.1} parent=0 // pred_fallthru
    _
  // Predicated region
  $region26: #{tpu_custom_call.1} parent=0 // pred_check
    _
  $region27: #{tpu_custom_call.1} parent=0 // pred_check_branch
    %30 = sbr.rel (0) target = $region29
  $region28: #{tpu_custom_call.1} parent=0 // pred_region
    _
  $region29: #{tpu_custom_call.1} parent=0 // pred_fallthru
    _
  // Predicated region
  $region30: #{tpu_custom_call.1} parent=0 // pred_check
    _
  $region31: #{tpu_custom_call.1} parent=0 // pred_check_branch
    %32 = sbr.rel (0) target = $region33
  $region32: #{tpu_custom_call.1} parent=0 // pred_region
    _
  $region33: #{tpu_custom_call.1} parent=0 // pred_fallthru
    _
  // Predicated region
  $region34: #{tpu_custom_call.1} parent=0 // pred_check
    _
  $region35: #{tpu_custom_call.1} parent=0 // pred_check_branch
    %34 = sbr.rel (0) target = $region37
  $region36: #{tpu_custom_call.1} parent=0 // pred_region
    _
  $region37: #{tpu_custom_call.1} parent=0 // pred_fallthru
    _
  // Predicated region
  $region38: #{tpu_custom_call.1} parent=0 // pred_check
    _
  $region39: #{tpu_custom_call.1} parent=0 // pred_check_branch
    %36 = sbr.rel (0) target = $region41
  $region40: #{tpu_custom_call.1} parent=0 // pred_region
    _
  $region41: #{tpu_custom_call.1} parent=0 // pred_fallthru
    _
  %v38 = vld [vmem:[%s2] sm:$0xf]
  %v39 = vld [vmem:[%s3] sm:$0xff]
  %v40 = vld [vmem:[%s3 + $0x8] sm:$0xff]
  %v41 = vld [vmem:[%s3 + $0x10] sm:$0xff]
  %v42 = vld [vmem:[%s3 + $0x18] sm:$0xff]
  %v43 = vld [vmem:[%s3 + $0x20] sm:$0xff]
  %v44 = vld [vmem:[%s3 + $0x28] sm:$0xff]
  %v45 = vld [vmem:[%s3 + $0x30] sm:$0xff]
  %v46 = vld [vmem:[%s3 + $0x38] sm:$0xff]
  %v47 = vld [vmem:[%s4] sm:$0x3]
  %v48 = vld [vmem:[%s5] sm:$0xf]
  %v49 = vld [vmem:[%s6] sm:$0xff]
  %v50 = vld [vmem:[%s6 + $0x8] sm:$0xff]
  %v51 = vld [vmem:[%s6 + $0x10] sm:$0xff]
  %v52 = vld [vmem:[%s6 + $0x18] sm:$0xff]
  %v53 = vld [vmem:[%s6 + $0x20] sm:$0xff]
  %v54 = vld [vmem:[%s6 + $0x28] sm:$0xff]
  %v55 = vld [vmem:[%s6 + $0x30] sm:$0xff]
  %v56 = vld [vmem:[%s6 + $0x38] sm:$0xff]
  %v57 = vld [vmem:[%s7] sm:$0x3]
  %v58 = vld [vmem:[%s8] sm:$0xf]
  %v59 = vld [vmem:[%s8 + $0x4] sm:$0xf]
  %v60 = vld [vmem:[%s8 + $0x8] sm:$0xf]
  %v61 = vld [vmem:[%s8 + $0xc] sm:$0xf]
  %v62 = vld [vmem:[%s8 + $0x10] sm:$0xf]
  %v63 = vld [vmem:[%s8 + $0x14] sm:$0xf]
  %v64 = vld [vmem:[%s8 + $0x18] sm:$0xf]
  %v65 = vld [vmem:[%s8 + $0x1c] sm:$0xf]
  %v66 = vld [vmem:[%s9] sm:$0x1]
  %v67 = vld [vmem:[%s0] sm:$0xff]
  %v68 = vld [vmem:[%s0 + $0x8] sm:$0xff]
  %v69 = vld [vmem:[%s0 + $0x10] sm:$0xff]
  %v70 = vld [vmem:[%s0 + $0x18] sm:$0xff]
  %v71 = vld [vmem:[%s0 + $0x20] sm:$0xff]
  %v72 = vld [vmem:[%s0 + $0x28] sm:$0xff]
  %v73 = vld [vmem:[%s0 + $0x30] sm:$0xff]
  %v74 = vld [vmem:[%s0 + $0x38] sm:$0xff]
  %v75 = vld [vmem:[%s1] sm:$0xff]
  %v76 = vld [vmem:[%s1 + $0x8] sm:$0xff]
  %v77 = vld [vmem:[%s1 + $0x10] sm:$0xff]
  %v78 = vld [vmem:[%s1 + $0x18] sm:$0xff]
  %v79 = vld [vmem:[%s1 + $0x20] sm:$0xff]
  %v80 = vld [vmem:[%s1 + $0x28] sm:$0xff]
  %v81 = vld [vmem:[%s1 + $0x30] sm:$0xff]
  %v82 = vld [vmem:[%s1 + $0x38] sm:$0xff]
  %v83 = vpack.c.bf16 %v68, %v67
  %v84 = vpack.c.bf16 %v70, %v69
  %v85 = vpack.c.bf16 %v72, %v71
  %v86 = vpack.c.bf16 %v74, %v73
  %v87 = vpack.c.bf16 %v76, %v75
  %v88 = vpack.c.bf16 %v78, %v77
  %v89 = vpack.c.bf16 %v80, %v79
  %v90 = vpack.c.bf16 %v82, %v81
  %v93 = vunpack.c.l.s4 1983009808
  %v94 = vunpack.c.0.s8 %v93
  %v95 = vlaneseq
  %v96 = vshrl.u32 %v95, 7
  %v97 = vsub.s32 %v94, %v96
  %v98 = vrot.slane %v38, %v97
  %v99 = vcombine.high %v98, %v98
  %v100 = vrot.slane %v98, 1
  %v101 = vrot.slane %v99, 1
  %vm102 = vcmask 15360
  %v104 = vsel %vm102, %v87, 0
  %v107 = vsel %vm102, %v88, 0
  %v110 = vsel %vm102, %v89, 0
  %v113 = vsel %vm102, %v90, 0
  %vm115 = vcmask 1040384
  %v117 = vsel %vm115, %v100, 0
  %v120 = vsel %vm115, %v101, 0
  %122 = vmatprep.subr.bf16.mxu0 0
  %123 = vmatpush1.bf16.msra.mxu0 0
  %124 = vmatprep.subr.bf16.mxu0 0
  %125 = vmatpush1.bf16.msra.mxu0 0
  %126 = vmatprep.subr.bf16.mxu0 0
  %127 = vmatpush1.bf16.msra.mxu0 0
  %128 = vmatprep.subr.bf16.mxu0 0
  %129 = vmatpush1.bf16.msra.mxu0 0
  %130 = vmatprep.subr.bf16.mxu0 0
  %131 = vmatpush1.bf16.msra.mxu0 0
  %132 = vmatprep.subr.bf16.mxu0 0
  %133 = vmatpush1.bf16.msra.mxu0 0
  %134 = vmatprep.subr.bf16.mxu0 0
  %135 = vmatpush1.bf16.msra.mxu0 0
  %136 = vmatprep.subr.bf16.mxu0 %v120
  %137 = vmatpush1.bf16.msra.mxu0 %v117
  %138 = vmatprep.subr.bf16.mxu0 0
  %139 = vmatpush2.bf16.msra.mxu0 0
  %140 = vmatprep.subr.bf16.mxu0 0
  %141 = vmatpush2.bf16.msra.mxu0 0
  %142 = vmatprep.subr.bf16.mxu0 0
  %143 = vmatpush2.bf16.msra.mxu0 0
  %144 = vmatprep.subr.bf16.mxu0 0
  %145 = vmatpush2.bf16.msra.mxu0 0
  %146 = vmatprep.subr.bf16.mxu0 0
  %147 = vmatpush2.bf16.msra.mxu0 0
  %148 = vmatprep.subr.bf16.mxu0 0
  %149 = vmatpush2.bf16.msra.mxu0 0
  %150 = vmatprep.subr.bf16.mxu0 0
  %151 = vmatpush2.bf16.msra.mxu0 0
  %152 = vmatprep.subr.bf16.mxu0 0
  %153 = vmatpush2.bf16.msra.mxu0 0
  %154 = vmatprep.mubr.bf16.mxu0 0
  %155 = vmatmul.mubr.bf16.gmra.mxu0 %v104
  %v156 = vpop.f32.mrf.mxu0
  %v157 = vadd.f32 0.0, %v156
  %v158 = vpop.f32.mrf.mxu0
  %v159 = vadd.f32 0.0, %v158
  %v160 = vpop.f32.mrf.mxu0
  %v161 = vadd.f32 0.0, %v160
  %v162 = vpop.f32.mrf.mxu0
  %v163 = vadd.f32 0.0, %v162
  %164 = vmatprep.mubr.bf16.mxu0 0
  %165 = vmatmul.mubr.bf16.gmra.mxu0 %v107
  %v166 = vpop.f32.mrf.mxu0
  %v167 = vadd.f32 0.0, %v166
  %v168 = vpop.f32.mrf.mxu0
  %v169 = vadd.f32 0.0, %v168
  %v170 = vpop.f32.mrf.mxu0
  %v171 = vadd.f32 0.0, %v170
  %v172 = vpop.f32.mrf.mxu0
  %v173 = vadd.f32 0.0, %v172
  %174 = vmatprep.mubr.bf16.mxu0 0
  %175 = vmatmul.mubr.bf16.gmra.mxu0 %v110
  %v176 = vpop.f32.mrf.mxu0
  %v177 = vadd.f32 0.0, %v176
  %v178 = vpop.f32.mrf.mxu0
  %v179 = vadd.f32 0.0, %v178
  %v180 = vpop.f32.mrf.mxu0
  %v181 = vadd.f32 0.0, %v180
  %v182 = vpop.f32.mrf.mxu0
  %v183 = vadd.f32 0.0, %v182
  %184 = vmatprep.mubr.bf16.mxu0 0
  %185 = vmatmul.mubr.bf16.gmra.mxu0 %v113
  %v186 = vpop.f32.mrf.mxu0
  %v187 = vadd.f32 0.0, %v186
  %v188 = vpop.f32.mrf.mxu0
  %v189 = vadd.f32 0.0, %v188
  %v190 = vpop.f32.mrf.mxu0
  %v191 = vadd.f32 0.0, %v190
  %v192 = vpop.f32.mrf.mxu0
  %v193 = vadd.f32 0.0, %v192
  %194 = vdwg.mxu0
  %v196 = vsel %vm102, %v83, 0
  %v199 = vsel %vm102, %v84, 0
  %v202 = vsel %vm102, %v85, 0
  %v205 = vsel %vm102, %v86, 0
  %v208 = vsel %vm115, %v98, 0
  %v211 = vsel %vm115, %v99, 0
  %213 = vmatprep.subr.bf16.mxu0 0
  %214 = vmatpush1.bf16.msra.mxu0 0
  %215 = vmatprep.subr.bf16.mxu0 0
  %216 = vmatpush1.bf16.msra.mxu0 0
  %217 = vmatprep.subr.bf16.mxu0 0
  %218 = vmatpush1.bf16.msra.mxu0 0
  %219 = vmatprep.subr.bf16.mxu0 0
  %220 = vmatpush1.bf16.msra.mxu0 0
  %221 = vmatprep.subr.bf16.mxu0 0
  %222 = vmatpush1.bf16.msra.mxu0 0
  %223 = vmatprep.subr.bf16.mxu0 0
  %224 = vmatpush1.bf16.msra.mxu0 0
  %225 = vmatprep.subr.bf16.mxu0 0
  %226 = vmatpush1.bf16.msra.mxu0 0
  %227 = vmatprep.subr.bf16.mxu0 %v211
  %228 = vmatpush1.bf16.msra.mxu0 %v208
  %229 = vmatprep.subr.bf16.mxu0 0
  %230 = vmatpush2.bf16.msra.mxu0 0
  %231 = vmatprep.subr.bf16.mxu0 0
  %232 = vmatpush2.bf16.msra.mxu0 0
  %233 = vmatprep.subr.bf16.mxu0 0
  %234 = vmatpush2.bf16.msra.mxu0 0
  %235 = vmatprep.subr.bf16.mxu0 0
  %236 = vmatpush2.bf16.msra.mxu0 0
  %237 = vmatprep.subr.bf16.mxu0 0
  %238 = vmatpush2.bf16.msra.mxu0 0
  %239 = vmatprep.subr.bf16.mxu0 0
  %240 = vmatpush2.bf16.msra.mxu0 0
  %241 = vmatprep.subr.bf16.mxu0 0
  %242 = vmatpush2.bf16.msra.mxu0 0
  %243 = vmatprep.subr.bf16.mxu0 0
  %244 = vmatpush2.bf16.msra.mxu0 0
  %245 = vmatprep.mubr.bf16.mxu0 0
  %246 = vmatmul.mubr.bf16.gmra.mxu0 %v196
  %v247 = vpop.f32.mrf.mxu0
  %v248 = vadd.f32 %v157, %v247
  %v249 = vpop.f32.mrf.mxu0
  %v250 = vadd.f32 %v159, %v249
  %v251 = vpop.f32.mrf.mxu0
  %v252 = vadd.f32 %v161, %v251
  %v253 = vpop.f32.mrf.mxu0
  %v254 = vadd.f32 %v163, %v253
  %255 = vmatprep.mubr.bf16.mxu0 0
  %256 = vmatmul.mubr.bf16.gmra.mxu0 %v199
  %v257 = vpop.f32.mrf.mxu0
  %v258 = vadd.f32 %v167, %v257
  %v259 = vpop.f32.mrf.mxu0
  %v260 = vadd.f32 %v169, %v259
  %v261 = vpop.f32.mrf.mxu0
  %v262 = vadd.f32 %v171, %v261
  %v263 = vpop.f32.mrf.mxu0
  %v264 = vadd.f32 %v173, %v263
  %265 = vmatprep.mubr.bf16.mxu0 0
  %266 = vmatmul.mubr.bf16.gmra.mxu0 %v202
  %v267 = vpop.f32.mrf.mxu0
  %v268 = vadd.f32 %v177, %v267
  %v269 = vpop.f32.mrf.mxu0
  %v270 = vadd.f32 %v179, %v269
  %v271 = vpop.f32.mrf.mxu0
  %v272 = vadd.f32 %v181, %v271
  %v273 = vpop.f32.mrf.mxu0
  %v274 = vadd.f32 %v183, %v273
  %275 = vmatprep.mubr.bf16.mxu0 0
  %276 = vmatmul.mubr.bf16.gmra.mxu0 %v205
  %v277 = vpop.f32.mrf.mxu0
  %v278 = vadd.f32 %v187, %v277
  %v279 = vpop.f32.mrf.mxu0
  %v280 = vadd.f32 %v189, %v279
  %v281 = vpop.f32.mrf.mxu0
  %v282 = vadd.f32 %v191, %v281
  %v283 = vpop.f32.mrf.mxu0
  %v284 = vadd.f32 %v193, %v283
  %285 = vdwg.mxu0
  %v287 = vlaneseq
  %v288 = vshrl.u32 %v287, 7
  %v289 = vsub.s32 0, %v288
  %v290 = vrot.slane %v47, %v289
  %v291 = vlaneseq
  %v292 = vshrl.u32 %v291, 7
  %v293 = vsub.s32 1, %v292
  %v294 = vrot.slane %v47, %v293
  %v297 = vadd.f32 %v248, %v290
  %v298 = vadd.f32 %v250, %v294
  %v299 = vadd.f32 %v252, %v290
  %v300 = vadd.f32 %v254, %v294
  %v301 = vadd.f32 %v258, %v290
  %v302 = vadd.f32 %v260, %v294
  %v303 = vadd.f32 %v262, %v290
  %v304 = vadd.f32 %v264, %v294
  %v305 = vadd.f32 %v268, %v290
  %v306 = vadd.f32 %v270, %v294
  %v307 = vadd.f32 %v272, %v290
  %v308 = vadd.f32 %v274, %v294
  %v309 = vadd.f32 %v278, %v290
  %v310 = vadd.f32 %v280, %v294
  %v311 = vadd.f32 %v282, %v290
  %v312 = vadd.f32 %v284, %v294
  %v321 = vunpack.c.l.b16 %v39
  %v322 = vunpack.c.h.b16 %v39
  %v323 = vunpack.c.l.b16 %v40
  %v324 = vunpack.c.h.b16 %v40
  %v325 = vunpack.c.l.b16 %v41
  %v326 = vunpack.c.h.b16 %v41
  %v327 = vunpack.c.l.b16 %v42
  %v328 = vunpack.c.h.b16 %v42
  %v329 = vunpack.c.l.b16 %v43
  %v330 = vunpack.c.h.b16 %v43
  %v331 = vunpack.c.l.b16 %v44
  %v332 = vunpack.c.h.b16 %v44
  %v333 = vunpack.c.l.b16 %v45
  %v334 = vunpack.c.h.b16 %v45
  %v335 = vunpack.c.l.b16 %v46
  %v336 = vunpack.c.h.b16 %v46
  %v337 = vpack.c.b16 %v323, %v321
  %v338 = vpack.c.b16 %v324, %v322
  %v339 = vpack.c.b16 %v327, %v325
  %v340 = vpack.c.b16 %v328, %v326
  %v341 = vpack.c.b16 %v331, %v329
  %v342 = vpack.c.b16 %v332, %v330
  %v343 = vpack.c.b16 %v335, %v333
  %v344 = vpack.c.b16 %v336, %v334
  %vm353 = vcmask 523264
  %v355 = vsel %vm353, 0, 0
  %357 = vmatprep.subr.bf16.mxu0 0
  %358 = vmatpush1.bf16.msra.mxu0 0
  %359 = vmatprep.subr.bf16.mxu0 0
  %360 = vmatpush1.bf16.msra.mxu0 0
  %361 = vmatprep.subr.bf16.mxu0 0
  %362 = vmatpush1.bf16.msra.mxu0 0
  %363 = vmatprep.subr.bf16.mxu0 0
  %364 = vmatpush1.bf16.msra.mxu0 0
  %365 = vmatprep.subr.bf16.mxu0 %v344
  %366 = vmatpush1.bf16.msra.mxu0 %v343
  %367 = vmatprep.subr.bf16.mxu0 %v342
  %368 = vmatpush1.bf16.msra.mxu0 %v341
  %369 = vmatprep.subr.bf16.mxu0 %v340
  %370 = vmatpush1.bf16.msra.mxu0 %v339
  %371 = vmatprep.subr.bf16.mxu0 %v338
  %372 = vmatpush1.bf16.msra.mxu0 %v337
  %373 = vmatprep.subr.bf16.mxu0 0
  %374 = vmatpush2.bf16.msra.mxu0 0
  %375 = vmatprep.subr.bf16.mxu0 0
  %376 = vmatpush2.bf16.msra.mxu0 0
  %377 = vmatprep.subr.bf16.mxu0 0
  %378 = vmatpush2.bf16.msra.mxu0 0
  %379 = vmatprep.subr.bf16.mxu0 0
  %380 = vmatpush2.bf16.msra.mxu0 0
  %381 = vmatprep.subr.bf16.mxu0 0
  %382 = vmatpush2.bf16.msra.mxu0 0
  %383 = vmatprep.subr.bf16.mxu0 0
  %384 = vmatpush2.bf16.msra.mxu0 0
  %385 = vmatprep.subr.bf16.mxu0 0
  %386 = vmatpush2.bf16.msra.mxu0 0
  %387 = vmatprep.subr.bf16.mxu0 0
  %388 = vmatpush2.bf16.msra.mxu0 0
  %389 = vmatprep.mubr.bf16.mxu0 0
  %390 = vmatmul.mubr.bf16.gmra.mxu0 %v355
  %v391 = vpop.f32.mrf.mxu0
  %v392 = vadd.f32 0.0, %v391
  %v393 = vpop.f32.mrf.mxu0
  %v394 = vadd.f32 0.0, %v393
  %v395 = vpop.f32.mrf.mxu0
  %v396 = vpop.f32.mrf.mxu0
  %397 = vdwg.mxu0
  %v398 = vadd.f32 %v297, %v392
  %v399 = vadd.f32 %v298, %v394
  %v400 = vxor.u32 %v398, 2147483648
  %v401 = vxor.u32 %v399, 2147483648
  %v402 = vmul.f32 %v400, 1.442695
  %v403 = vpow.pop %v402
  %v404 = vmul.f32 %v401, 1.442695
  %v405 = vpow.pop %v404
  %v406 = vadd.f32 %v403, 1.0
  %v407 = vadd.f32 %v405, 1.0
  %v408 = vrcp.pop %v406
  %v409 = vmul.f32 1.0, %v408
  %v410 = vrcp.pop %v407
  %v411 = vmul.f32 1.0, %v410
  %v412 = vmul.f32 %v411, 2.0
  %v413 = vsub.f32 %v412, 1.0
  %v414 = vmul.f32 %v409, 0.0
  %v415 = vmul.f32 %v409, %v413
  %417 = vrot.lane.b32.xlu0 %v415, 64
  %v418 = vpop.permute.xlu0 %417
  %v420 = vadd.f32 %v414, %v418
  %v421 = vmul.f32 %v420, 2.0
  %v422 = vxor.u32 %v421, 2147483648
  %v423 = vmul.f32 %v422, 1.442695
  %v424 = vpow.pop %v423
  %v425 = vadd.f32 %v424, 1.0
  %v426 = vrcp.pop %v425
  %v427 = vmul.f32 1.0, %v426
  %v428 = vmul.f32 %v427, 2.0
  %v429 = vsub.f32 %v428, 1.0
  %v430 = vmul.f32 %v411, %v429
  %v431 = vpack.c.bf16 %v430, %v430
  %433 = vrot.lane.b32.xlu0 %v431, 64
  %v434 = vpop.permute.xlu0 %433
  %v436 = vsel %vm353, %v434, 0
  %438 = vmatprep.subr.bf16.mxu0 0
  %439 = vmatpush1.bf16.msra.mxu0 0
  %440 = vmatprep.subr.bf16.mxu0 0
  %441 = vmatpush1.bf16.msra.mxu0 0
  %442 = vmatprep.subr.bf16.mxu0 0
  %443 = vmatpush1.bf16.msra.mxu0 0
  %444 = vmatprep.subr.bf16.mxu0 0
  %445 = vmatpush1.bf16.msra.mxu0 0
  %446 = vmatprep.subr.bf16.mxu0 %v344
  %447 = vmatpush1.bf16.msra.mxu0 %v343
  %448 = vmatprep.subr.bf16.mxu0 %v342
  %449 = vmatpush1.bf16.msra.mxu0 %v341
  %450 = vmatprep.subr.bf16.mxu0 %v340
  %451 = vmatpush1.bf16.msra.mxu0 %v339
  %452 = vmatprep.subr.bf16.mxu0 %v338
  %453 = vmatpush1.bf16.msra.mxu0 %v337
  %454 = vmatprep.subr.bf16.mxu0 0
  %455 = vmatpush2.bf16.msra.mxu0 0
  %456 = vmatprep.subr.bf16.mxu0 0
  %457 = vmatpush2.bf16.msra.mxu0 0
  %458 = vmatprep.subr.bf16.mxu0 0
  %459 = vmatpush2.bf16.msra.mxu0 0
  %460 = vmatprep.subr.bf16.mxu0 0
  %461 = vmatpush2.bf16.msra.mxu0 0
  %462 = vmatprep.subr.bf16.mxu0 0
  %463 = vmatpush2.bf16.msra.mxu0 0
  %464 = vmatprep.subr.bf16.mxu0 0
  %465 = vmatpush2.bf16.msra.mxu0 0
  %466 = vmatprep.subr.bf16.mxu0 0
  %467 = vmatpush2.bf16.msra.mxu0 0
  %468 = vmatprep.subr.bf16.mxu0 0
  %469 = vmatpush2.bf16.msra.mxu0 0
  %470 = vmatprep.mubr.bf16.mxu0 0
  %471 = vmatmul.mubr.bf16.gmra.mxu0 %v436
  %v472 = vpop.f32.mrf.mxu0
  %v473 = vadd.f32 0.0, %v472
  %v474 = vpop.f32.mrf.mxu0
  %v475 = vadd.f32 0.0, %v474
  %v476 = vpop.f32.mrf.mxu0
  %v477 = vpop.f32.mrf.mxu0
  %478 = vdwg.mxu0
  %v479 = vadd.f32 %v299, %v473
  %v480 = vadd.f32 %v300, %v475
  %v481 = vxor.u32 %v479, 2147483648
  %v482 = vxor.u32 %v480, 2147483648
  %v483 = vmul.f32 %v481, 1.442695
  %v484 = vpow.pop %v483
  %v485 = vmul.f32 %v482, 1.442695
  %v486 = vpow.pop %v485
  %v487 = vadd.f32 %v484, 1.0
  %v488 = vadd.f32 %v486, 1.0
  %v489 = vrcp.pop %v487
  %v490 = vmul.f32 1.0, %v489
  %v491 = vrcp.pop %v488
  %v492 = vmul.f32 1.0, %v491
  %v493 = vmul.f32 %v492, 2.0
  %v494 = vsub.f32 %v493, 1.0
  %v495 = vmul.f32 %v490, %v420
  %v496 = vmul.f32 %v490, %v494
  %498 = vrot.lane.b32.xlu0 %v496, 64
  %v499 = vpop.permute.xlu0 %498
  %v501 = vadd.f32 %v495, %v499
  %v502 = vmul.f32 %v501, 2.0
  %v503 = vxor.u32 %v502, 2147483648
  %v504 = vmul.f32 %v503, 1.442695
  %v505 = vpow.pop %v504
  %v506 = vadd.f32 %v505, 1.0
  %v507 = vrcp.pop %v506
  %v508 = vmul.f32 1.0, %v507
  %v509 = vmul.f32 %v508, 2.0
  %v510 = vsub.f32 %v509, 1.0
  %v511 = vmul.f32 %v492, %v510
  %v512 = vpack.c.bf16 %v511, %v511
  %514 = vrot.lane.b32.xlu0 %v512, 64
  %v515 = vpop.permute.xlu0 %514
  %v517 = vsel %vm353, %v515, 0
  %519 = vmatprep.subr.bf16.mxu0 0
  %520 = vmatpush1.bf16.msra.mxu0 0
  %521 = vmatprep.subr.bf16.mxu0 0
  %522 = vmatpush1.bf16.msra.mxu0 0
  %523 = vmatprep.subr.bf16.mxu0 0
  %524 = vmatpush1.bf16.msra.mxu0 0
  %525 = vmatprep.subr.bf16.mxu0 0
  %526 = vmatpush1.bf16.msra.mxu0 0
  %527 = vmatprep.subr.bf16.mxu0 %v344
  %528 = vmatpush1.bf16.msra.mxu0 %v343
  %529 = vmatprep.subr.bf16.mxu0 %v342
  %530 = vmatpush1.bf16.msra.mxu0 %v341
  %531 = vmatprep.subr.bf16.mxu0 %v340
  %532 = vmatpush1.bf16.msra.mxu0 %v339
  %533 = vmatprep.subr.bf16.mxu0 %v338
  %534 = vmatpush1.bf16.msra.mxu0 %v337
  %535 = vmatprep.subr.bf16.mxu0 0
  %536 = vmatpush2.bf16.msra.mxu0 0
  %537 = vmatprep.subr.bf16.mxu0 0
  %538 = vmatpush2.bf16.msra.mxu0 0
  %539 = vmatprep.subr.bf16.mxu0 0
  %540 = vmatpush2.bf16.msra.mxu0 0
  %541 = vmatprep.subr.bf16.mxu0 0
  %542 = vmatpush2.bf16.msra.mxu0 0
  %543 = vmatprep.subr.bf16.mxu0 0
  %544 = vmatpush2.bf16.msra.mxu0 0
  %545 = vmatprep.subr.bf16.mxu0 0
  %546 = vmatpush2.bf16.msra.mxu0 0
  %547 = vmatprep.subr.bf16.mxu0 0
  %548 = vmatpush2.bf16.msra.mxu0 0
  %549 = vmatprep.subr.bf16.mxu0 0
  %550 = vmatpush2.bf16.msra.mxu0 0
  %551 = vmatprep.mubr.bf16.mxu0 0
  %552 = vmatmul.mubr.bf16.gmra.mxu0 %v517
  %v553 = vpop.f32.mrf.mxu0
  %v554 = vadd.f32 0.0, %v553
  %v555 = vpop.f32.mrf.mxu0
  %v556 = vadd.f32 0.0, %v555
  %v557 = vpop.f32.mrf.mxu0
  %v558 = vpop.f32.mrf.mxu0
  %559 = vdwg.mxu0
  %v560 = vadd.f32 %v301, %v554
  %v561 = vadd.f32 %v302, %v556
  %v562 = vxor.u32 %v560, 2147483648
  %v563 = vxor.u32 %v561, 2147483648
  %v564 = vmul.f32 %v562, 1.442695
  %v565 = vpow.pop %v564
  %v566 = vmul.f32 %v563, 1.442695
  %v567 = vpow.pop %v566
  %v568 = vadd.f32 %v565, 1.0
  %v569 = vadd.f32 %v567, 1.0
  %v570 = vrcp.pop %v568
  %v571 = vmul.f32 1.0, %v570
  %v572 = vrcp.pop %v569
  %v573 = vmul.f32 1.0, %v572
  %v574 = vmul.f32 %v573, 2.0
  %v575 = vsub.f32 %v574, 1.0
  %v576 = vmul.f32 %v571, %v501
  %v577 = vmul.f32 %v571, %v575
  %579 = vrot.lane.b32.xlu0 %v577, 64
  %v580 = vpop.permute.xlu0 %579
  %v582 = vadd.f32 %v576, %v580
  %v583 = vmul.f32 %v582, 2.0
  %v584 = vxor.u32 %v583, 2147483648
  %v585 = vmul.f32 %v584, 1.442695
  %v586 = vpow.pop %v585
  %v587 = vadd.f32 %v586, 1.0
  %v588 = vrcp.pop %v587
  %v589 = vmul.f32 1.0, %v588
  %v590 = vmul.f32 %v589, 2.0
  %v591 = vsub.f32 %v590, 1.0
  %v592 = vmul.f32 %v573, %v591
  %v593 = vpack.c.bf16 %v592, %v592
  %595 = vrot.lane.b32.xlu0 %v593, 64
  %v596 = vpop.permute.xlu0 %595
  %v598 = vsel %vm353, %v596, 0
  %600 = vmatprep.subr.bf16.mxu0 0
  %601 = vmatpush1.bf16.msra.mxu0 0
  %602 = vmatprep.subr.bf16.mxu0 0
  %603 = vmatpush1.bf16.msra.mxu0 0
  %604 = vmatprep.subr.bf16.mxu0 0
  %605 = vmatpush1.bf16.msra.mxu0 0
  %606 = vmatprep.subr.bf16.mxu0 0
  %607 = vmatpush1.bf16.msra.mxu0 0
  %608 = vmatprep.subr.bf16.mxu0 %v344
  %609 = vmatpush1.bf16.msra.mxu0 %v343
  %610 = vmatprep.subr.bf16.mxu0 %v342
  %611 = vmatpush1.bf16.msra.mxu0 %v341
  %612 = vmatprep.subr.bf16.mxu0 %v340
  %613 = vmatpush1.bf16.msra.mxu0 %v339
  %614 = vmatprep.subr.bf16.mxu0 %v338
  %615 = vmatpush1.bf16.msra.mxu0 %v337
  %616 = vmatprep.subr.bf16.mxu0 0
  %617 = vmatpush2.bf16.msra.mxu0 0
  %618 = vmatprep.subr.bf16.mxu0 0
  %619 = vmatpush2.bf16.msra.mxu0 0
  %620 = vmatprep.subr.bf16.mxu0 0
  %621 = vmatpush2.bf16.msra.mxu0 0
  %622 = vmatprep.subr.bf16.mxu0 0
  %623 = vmatpush2.bf16.msra.mxu0 0
  %624 = vmatprep.subr.bf16.mxu0 0
  %625 = vmatpush2.bf16.msra.mxu0 0
  %626 = vmatprep.subr.bf16.mxu0 0
  %627 = vmatpush2.bf16.msra.mxu0 0
  %628 = vmatprep.subr.bf16.mxu0 0
  %629 = vmatpush2.bf16.msra.mxu0 0
  %630 = vmatprep.subr.bf16.mxu0 0
  %631 = vmatpush2.bf16.msra.mxu0 0
  %632 = vmatprep.mubr.bf16.mxu0 0
  %633 = vmatmul.mubr.bf16.gmra.mxu0 %v598
  %v634 = vpop.f32.mrf.mxu0
  %v635 = vadd.f32 0.0, %v634
  %v636 = vpop.f32.mrf.mxu0
  %v637 = vadd.f32 0.0, %v636
  %v638 = vpop.f32.mrf.mxu0
  %v639 = vpop.f32.mrf.mxu0
  %640 = vdwg.mxu0
  %v641 = vadd.f32 %v303, %v635
  %v642 = vadd.f32 %v304, %v637
  %v643 = vxor.u32 %v641, 2147483648
  %v644 = vxor.u32 %v642, 2147483648
  %v645 = vmul.f32 %v643, 1.442695
  %v646 = vpow.pop %v645
  %v647 = vmul.f32 %v644, 1.442695
  %v648 = vpow.pop %v647
  %v649 = vadd.f32 %v646, 1.0
  %v650 = vadd.f32 %v648, 1.0
  %v651 = vrcp.pop %v649
  %v652 = vmul.f32 1.0, %v651
  %v653 = vrcp.pop %v650
  %v654 = vmul.f32 1.0, %v653
  %v655 = vmul.f32 %v654, 2.0
  %v656 = vsub.f32 %v655, 1.0
  %v657 = vmul.f32 %v652, %v582
  %v658 = vmul.f32 %v652, %v656
  %660 = vrot.lane.b32.xlu0 %v658, 64
  %v661 = vpop.permute.xlu0 %660
  %v663 = vadd.f32 %v657, %v661
  %v664 = vmul.f32 %v663, 2.0
  %v665 = vxor.u32 %v664, 2147483648
  %v666 = vmul.f32 %v665, 1.442695
  %v667 = vpow.pop %v666
  %v668 = vadd.f32 %v667, 1.0
  %v669 = vrcp.pop %v668
  %v670 = vmul.f32 1.0, %v669
  %v671 = vmul.f32 %v670, 2.0
  %v672 = vsub.f32 %v671, 1.0
  %v673 = vmul.f32 %v654, %v672
  %v674 = vpack.c.bf16 %v673, %v673
  %676 = vrot.lane.b32.xlu0 %v674, 64
  %v677 = vpop.permute.xlu0 %676
  %v679 = vsel %vm353, %v677, 0
  %681 = vmatprep.subr.bf16.mxu0 0
  %682 = vmatpush1.bf16.msra.mxu0 0
  %683 = vmatprep.subr.bf16.mxu0 0
  %684 = vmatpush1.bf16.msra.mxu0 0
  %685 = vmatprep.subr.bf16.mxu0 0
  %686 = vmatpush1.bf16.msra.mxu0 0
  %687 = vmatprep.subr.bf16.mxu0 0
  %688 = vmatpush1.bf16.msra.mxu0 0
  %689 = vmatprep.subr.bf16.mxu0 %v344
  %690 = vmatpush1.bf16.msra.mxu0 %v343
  %691 = vmatprep.subr.bf16.mxu0 %v342
  %692 = vmatpush1.bf16.msra.mxu0 %v341
  %693 = vmatprep.subr.bf16.mxu0 %v340
  %694 = vmatpush1.bf16.msra.mxu0 %v339
  %695 = vmatprep.subr.bf16.mxu0 %v338
  %696 = vmatpush1.bf16.msra.mxu0 %v337
  %697 = vmatprep.subr.bf16.mxu0 0
  %698 = vmatpush2.bf16.msra.mxu0 0
  %699 = vmatprep.subr.bf16.mxu0 0
  %700 = vmatpush2.bf16.msra.mxu0 0
  %701 = vmatprep.subr.bf16.mxu0 0
  %702 = vmatpush2.bf16.msra.mxu0 0
  %703 = vmatprep.subr.bf16.mxu0 0
  %704 = vmatpush2.bf16.msra.mxu0 0
  %705 = vmatprep.subr.bf16.mxu0 0
  %706 = vmatpush2.bf16.msra.mxu0 0
  %707 = vmatprep.subr.bf16.mxu0 0
  %708 = vmatpush2.bf16.msra.mxu0 0
  %709 = vmatprep.subr.bf16.mxu0 0
  %710 = vmatpush2.bf16.msra.mxu0 0
  %711 = vmatprep.subr.bf16.mxu0 0
  %712 = vmatpush2.bf16.msra.mxu0 0
  %713 = vmatprep.mubr.bf16.mxu0 0
  %714 = vmatmul.mubr.bf16.gmra.mxu0 %v679
  %v715 = vpop.f32.mrf.mxu0
  %v716 = vadd.f32 0.0, %v715
  %v717 = vpop.f32.mrf.mxu0
  %v718 = vadd.f32 0.0, %v717
  %v719 = vpop.f32.mrf.mxu0
  %v720 = vpop.f32.mrf.mxu0
  %721 = vdwg.mxu0
  %v722 = vadd.f32 %v305, %v716
  %v723 = vadd.f32 %v306, %v718
  %v724 = vxor.u32 %v722, 2147483648
  %v725 = vxor.u32 %v723, 2147483648
  %v726 = vmul.f32 %v724, 1.442695
  %v727 = vpow.pop %v726
  %v728 = vmul.f32 %v725, 1.442695
  %v729 = vpow.pop %v728
  %v730 = vadd.f32 %v727, 1.0
  %v731 = vadd.f32 %v729, 1.0
  %v732 = vrcp.pop %v730
  %v733 = vmul.f32 1.0, %v732
  %v734 = vrcp.pop %v731
  %v735 = vmul.f32 1.0, %v734
  %v736 = vmul.f32 %v735, 2.0
  %v737 = vsub.f32 %v736, 1.0
  %v738 = vmul.f32 %v733, %v663
  %v739 = vmul.f32 %v733, %v737
  %741 = vrot.lane.b32.xlu0 %v739, 64
  %v742 = vpop.permute.xlu0 %741
  %v744 = vadd.f32 %v738, %v742
  %v745 = vmul.f32 %v744, 2.0
  %v746 = vxor.u32 %v745, 2147483648
  %v747 = vmul.f32 %v746, 1.442695
  %v748 = vpow.pop %v747
  %v749 = vadd.f32 %v748, 1.0
  %v750 = vrcp.pop %v749
  %v751 = vmul.f32 1.0, %v750
  %v752 = vmul.f32 %v751, 2.0
  %v753 = vsub.f32 %v752, 1.0
  %v754 = vmul.f32 %v735, %v753
  %v755 = vpack.c.bf16 %v754, %v754
  %757 = vrot.lane.b32.xlu0 %v755, 64
  %v758 = vpop.permute.xlu0 %757
  %v760 = vsel %vm353, %v758, 0
  %762 = vmatprep.subr.bf16.mxu0 0
  %763 = vmatpush1.bf16.msra.mxu0 0
  %764 = vmatprep.subr.bf16.mxu0 0
  %765 = vmatpush1.bf16.msra.mxu0 0
  %766 = vmatprep.subr.bf16.mxu0 0
  %767 = vmatpush1.bf16.msra.mxu0 0
  %768 = vmatprep.subr.bf16.mxu0 0
  %769 = vmatpush1.bf16.msra.mxu0 0
  %770 = vmatprep.subr.bf16.mxu0 %v344
  %771 = vmatpush1.bf16.msra.mxu0 %v343
  %772 = vmatprep.subr.bf16.mxu0 %v342
  %773 = vmatpush1.bf16.msra.mxu0 %v341
  %774 = vmatprep.subr.bf16.mxu0 %v340
  %775 = vmatpush1.bf16.msra.mxu0 %v339
  %776 = vmatprep.subr.bf16.mxu0 %v338
  %777 = vmatpush1.bf16.msra.mxu0 %v337
  %778 = vmatprep.subr.bf16.mxu0 0
  %779 = vmatpush2.bf16.msra.mxu0 0
  %780 = vmatprep.subr.bf16.mxu0 0
  %781 = vmatpush2.bf16.msra.mxu0 0
  %782 = vmatprep.subr.bf16.mxu0 0
  %783 = vmatpush2.bf16.msra.mxu0 0
  %784 = vmatprep.subr.bf16.mxu0 0
  %785 = vmatpush2.bf16.msra.mxu0 0
  %786 = vmatprep.subr.bf16.mxu0 0
  %787 = vmatpush2.bf16.msra.mxu0 0
  %788 = vmatprep.subr.bf16.mxu0 0
  %789 = vmatpush2.bf16.msra.mxu0 0
  %790 = vmatprep.subr.bf16.mxu0 0
  %791 = vmatpush2.bf16.msra.mxu0 0
  %792 = vmatprep.subr.bf16.mxu0 0
  %793 = vmatpush2.bf16.msra.mxu0 0
  %794 = vmatprep.mubr.bf16.mxu0 0
  %795 = vmatmul.mubr.bf16.gmra.mxu0 %v760
  %v796 = vpop.f32.mrf.mxu0
  %v797 = vadd.f32 0.0, %v796
  %v798 = vpop.f32.mrf.mxu0
  %v799 = vadd.f32 0.0, %v798
  %v800 = vpop.f32.mrf.mxu0
  %v801 = vpop.f32.mrf.mxu0
  %802 = vdwg.mxu0
  %v803 = vadd.f32 %v307, %v797
  %v804 = vadd.f32 %v308, %v799
  %v805 = vxor.u32 %v803, 2147483648
  %v806 = vxor.u32 %v804, 2147483648
  %v807 = vmul.f32 %v805, 1.442695
  %v808 = vpow.pop %v807
  %v809 = vmul.f32 %v806, 1.442695
  %v810 = vpow.pop %v809
  %v811 = vadd.f32 %v808, 1.0
  %v812 = vadd.f32 %v810, 1.0
  %v813 = vrcp.pop %v811
  %v814 = vmul.f32 1.0, %v813
  %v815 = vrcp.pop %v812
  %v816 = vmul.f32 1.0, %v815
  %v817 = vmul.f32 %v816, 2.0
  %v818 = vsub.f32 %v817, 1.0
  %v819 = vmul.f32 %v814, %v744
  %v820 = vmul.f32 %v814, %v818
  %822 = vrot.lane.b32.xlu0 %v820, 64
  %v823 = vpop.permute.xlu0 %822
  %v825 = vadd.f32 %v819, %v823
  %v826 = vmul.f32 %v825, 2.0
  %v827 = vxor.u32 %v826, 2147483648
  %v828 = vmul.f32 %v827, 1.442695
  %v829 = vpow.pop %v828
  %v830 = vadd.f32 %v829, 1.0
  %v831 = vrcp.pop %v830
  %v832 = vmul.f32 1.0, %v831
  %v833 = vmul.f32 %v832, 2.0
  %v834 = vsub.f32 %v833, 1.0
  %v835 = vmul.f32 %v816, %v834
  %v836 = vpack.c.bf16 %v835, %v835
  %838 = vrot.lane.b32.xlu0 %v836, 64
  %v839 = vpop.permute.xlu0 %838
  %v841 = vsel %vm353, %v839, 0
  %843 = vmatprep.subr.bf16.mxu0 0
  %844 = vmatpush1.bf16.msra.mxu0 0
  %845 = vmatprep.subr.bf16.mxu0 0
  %846 = vmatpush1.bf16.msra.mxu0 0
  %847 = vmatprep.subr.bf16.mxu0 0
  %848 = vmatpush1.bf16.msra.mxu0 0
  %849 = vmatprep.subr.bf16.mxu0 0
  %850 = vmatpush1.bf16.msra.mxu0 0
  %851 = vmatprep.subr.bf16.mxu0 %v344
  %852 = vmatpush1.bf16.msra.mxu0 %v343
  %853 = vmatprep.subr.bf16.mxu0 %v342
  %854 = vmatpush1.bf16.msra.mxu0 %v341
  %855 = vmatprep.subr.bf16.mxu0 %v340
  %856 = vmatpush1.bf16.msra.mxu0 %v339
  %857 = vmatprep.subr.bf16.mxu0 %v338
  %858 = vmatpush1.bf16.msra.mxu0 %v337
  %859 = vmatprep.subr.bf16.mxu0 0
  %860 = vmatpush2.bf16.msra.mxu0 0
  %861 = vmatprep.subr.bf16.mxu0 0
  %862 = vmatpush2.bf16.msra.mxu0 0
  %863 = vmatprep.subr.bf16.mxu0 0
  %864 = vmatpush2.bf16.msra.mxu0 0
  %865 = vmatprep.subr.bf16.mxu0 0
  %866 = vmatpush2.bf16.msra.mxu0 0
  %867 = vmatprep.subr.bf16.mxu0 0
  %868 = vmatpush2.bf16.msra.mxu0 0
  %869 = vmatprep.subr.bf16.mxu0 0
  %870 = vmatpush2.bf16.msra.mxu0 0
  %871 = vmatprep.subr.bf16.mxu0 0
  %872 = vmatpush2.bf16.msra.mxu0 0
  %873 = vmatprep.subr.bf16.mxu0 0
  %874 = vmatpush2.bf16.msra.mxu0 0
  %875 = vmatprep.mubr.bf16.mxu0 0
  %876 = vmatmul.mubr.bf16.gmra.mxu0 %v841
  %v877 = vpop.f32.mrf.mxu0
  %v878 = vadd.f32 0.0, %v877
  %v879 = vpop.f32.mrf.mxu0
  %v880 = vadd.f32 0.0, %v879
  %v881 = vpop.f32.mrf.mxu0
  %v882 = vpop.f32.mrf.mxu0
  %883 = vdwg.mxu0
  %v884 = vadd.f32 %v309, %v878
  %v885 = vadd.f32 %v310, %v880
  %v886 = vxor.u32 %v884, 2147483648
  %v887 = vxor.u32 %v885, 2147483648
  %v888 = vmul.f32 %v886, 1.442695
  %v889 = vpow.pop %v888
  %v890 = vmul.f32 %v887, 1.442695
  %v891 = vpow.pop %v890
  %v892 = vadd.f32 %v889, 1.0
  %v893 = vadd.f32 %v891, 1.0
  %v894 = vrcp.pop %v892
  %v895 = vmul.f32 1.0, %v894
  %v896 = vrcp.pop %v893
  %v897 = vmul.f32 1.0, %v896
  %v898 = vmul.f32 %v897, 2.0
  %v899 = vsub.f32 %v898, 1.0
  %v900 = vmul.f32 %v895, %v825
  %v901 = vmul.f32 %v895, %v899
  %903 = vrot.lane.b32.xlu0 %v901, 64
  %v904 = vpop.permute.xlu0 %903
  %v906 = vadd.f32 %v900, %v904
  %v907 = vmul.f32 %v906, 2.0
  %v908 = vxor.u32 %v907, 2147483648
  %v909 = vmul.f32 %v908, 1.442695
  %v910 = vpow.pop %v909
  %v911 = vadd.f32 %v910, 1.0
  %v912 = vrcp.pop %v911
  %v913 = vmul.f32 1.0, %v912
  %v914 = vmul.f32 %v913, 2.0
  %v915 = vsub.f32 %v914, 1.0
  %v916 = vmul.f32 %v897, %v915
  %v917 = vpack.c.bf16 %v916, %v916
  %919 = vrot.lane.b32.xlu0 %v917, 64
  %v920 = vpop.permute.xlu0 %919
  %v922 = vsel %vm353, %v920, 0
  %924 = vmatprep.subr.bf16.mxu0 0
  %925 = vmatpush1.bf16.msra.mxu0 0
  %926 = vmatprep.subr.bf16.mxu0 0
  %927 = vmatpush1.bf16.msra.mxu0 0
  %928 = vmatprep.subr.bf16.mxu0 0
  %929 = vmatpush1.bf16.msra.mxu0 0
  %930 = vmatprep.subr.bf16.mxu0 0
  %931 = vmatpush1.bf16.msra.mxu0 0
  %932 = vmatprep.subr.bf16.mxu0 %v344
  %933 = vmatpush1.bf16.msra.mxu0 %v343
  %934 = vmatprep.subr.bf16.mxu0 %v342
  %935 = vmatpush1.bf16.msra.mxu0 %v341
  %936 = vmatprep.subr.bf16.mxu0 %v340
  %937 = vmatpush1.bf16.msra.mxu0 %v339
  %938 = vmatprep.subr.bf16.mxu0 %v338
  %939 = vmatpush1.bf16.msra.mxu0 %v337
  %940 = vmatprep.subr.bf16.mxu0 0
  %941 = vmatpush2.bf16.msra.mxu0 0
  %942 = vmatprep.subr.bf16.mxu0 0
  %943 = vmatpush2.bf16.msra.mxu0 0
  %944 = vmatprep.subr.bf16.mxu0 0
  %945 = vmatpush2.bf16.msra.mxu0 0
  %946 = vmatprep.subr.bf16.mxu0 0
  %947 = vmatpush2.bf16.msra.mxu0 0
  %948 = vmatprep.subr.bf16.mxu0 0
  %949 = vmatpush2.bf16.msra.mxu0 0
  %950 = vmatprep.subr.bf16.mxu0 0
  %951 = vmatpush2.bf16.msra.mxu0 0
  %952 = vmatprep.subr.bf16.mxu0 0
  %953 = vmatpush2.bf16.msra.mxu0 0
  %954 = vmatprep.subr.bf16.mxu0 0
  %955 = vmatpush2.bf16.msra.mxu0 0
  %956 = vmatprep.mubr.bf16.mxu0 0
  %957 = vmatmul.mubr.bf16.gmra.mxu0 %v922
  %v958 = vpop.f32.mrf.mxu0
  %v959 = vadd.f32 0.0, %v958
  %v960 = vpop.f32.mrf.mxu0
  %v961 = vadd.f32 0.0, %v960
  %v962 = vpop.f32.mrf.mxu0
  %v963 = vpop.f32.mrf.mxu0
  %964 = vdwg.mxu0
  %v965 = vadd.f32 %v311, %v959
  %v966 = vadd.f32 %v312, %v961
  %v967 = vxor.u32 %v965, 2147483648
  %v968 = vxor.u32 %v966, 2147483648
  %v969 = vmul.f32 %v967, 1.442695
  %v970 = vpow.pop %v969
  %v971 = vmul.f32 %v968, 1.442695
  %v972 = vpow.pop %v971
  %v973 = vadd.f32 %v970, 1.0
  %v974 = vadd.f32 %v972, 1.0
  %v975 = vrcp.pop %v973
  %v976 = vmul.f32 1.0, %v975
  %v977 = vrcp.pop %v974
  %v978 = vmul.f32 1.0, %v977
  %v979 = vmul.f32 %v978, 2.0
  %v980 = vsub.f32 %v979, 1.0
  %v981 = vmul.f32 %v976, %v906
  %v982 = vmul.f32 %v976, %v980
  %984 = vrot.lane.b32.xlu0 %v982, 64
  %v985 = vpop.permute.xlu0 %984
  %v987 = vadd.f32 %v981, %v985
  %v988 = vmul.f32 %v987, 2.0
  %v989 = vxor.u32 %v988, 2147483648
  %v990 = vmul.f32 %v989, 1.442695
  %v991 = vpow.pop %v990
  %v992 = vadd.f32 %v991, 1.0
  %v993 = vrcp.pop %v992
  %v994 = vmul.f32 1.0, %v993
  %v995 = vmul.f32 %v994, 2.0
  %v996 = vsub.f32 %v995, 1.0
  %v997 = vmul.f32 %v978, %v996
  %999 = vrot.lane.b32.xlu0 %v997, 96
  %v1000 = vpop.permute.xlu0 %999
  %v1002 = vadd.f32 %v997, %v1000
  %1004 = vrot.lane.b32.xlu0 %v1002, 64
  %v1005 = vpop.permute.xlu0 %1004
  %vm1007 = vcmask 261120
  %v1008 = vsel %vm1007, %v1005, %v1000
  %1010 = vrot.lane.b32.xlu0 %v987, 96
  %v1011 = vpop.permute.xlu0 %1010
  %v1013 = vadd.f32 %v987, %v1011
  %1015 = vrot.lane.b32.xlu0 %v1013, 64
  %v1016 = vpop.permute.xlu0 %1015
  %v1018 = vsel %vm1007, %v1016, %v1011
  %v1019 = vpack.c.bf16 %v82, %v82
  %v1020 = vpack.c.bf16 %v74, %v74
  %v1023 = vunpack.c.l.s4 1983009808
  %v1024 = vunpack.c.0.s8 %v1023
  %v1025 = vlaneseq
  %v1026 = vshrl.u32 %v1025, 7
  %v1027 = vsub.s32 %v1024, %v1026
  %v1028 = vrot.slane %v48, %v1027
  %v1029 = vcombine.high %v1028, %v1028
  %v1030 = vrot.slane %v1028, 1
  %v1031 = vrot.slane %v1029, 1
  %v1033 = vsel %vm102, %v1020, 0
  %v1036 = vsel %vm115, %v1030, 0
  %v1039 = vsel %vm115, %v1031, 0
  %1041 = vmatprep.subr.bf16.mxu0 0
  %1042 = vmatpush1.bf16.msra.mxu0 0
  %1043 = vmatprep.subr.bf16.mxu0 0
  %1044 = vmatpush1.bf16.msra.mxu0 0
  %1045 = vmatprep.subr.bf16.mxu0 0
  %1046 = vmatpush1.bf16.msra.mxu0 0
  %1047 = vmatprep.subr.bf16.mxu0 0
  %1048 = vmatpush1.bf16.msra.mxu0 0
  %1049 = vmatprep.subr.bf16.mxu0 0
  %1050 = vmatpush1.bf16.msra.mxu0 0
  %1051 = vmatprep.subr.bf16.mxu0 0
  %1052 = vmatpush1.bf16.msra.mxu0 0
  %1053 = vmatprep.subr.bf16.mxu0 0
  %1054 = vmatpush1.bf16.msra.mxu0 0
  %1055 = vmatprep.subr.bf16.mxu0 %v1039
  %1056 = vmatpush1.bf16.msra.mxu0 %v1036
  %1057 = vmatprep.subr.bf16.mxu0 0
  %1058 = vmatpush2.bf16.msra.mxu0 0
  %1059 = vmatprep.subr.bf16.mxu0 0
  %1060 = vmatpush2.bf16.msra.mxu0 0
  %1061 = vmatprep.subr.bf16.mxu0 0
  %1062 = vmatpush2.bf16.msra.mxu0 0
  %1063 = vmatprep.subr.bf16.mxu0 0
  %1064 = vmatpush2.bf16.msra.mxu0 0
  %1065 = vmatprep.subr.bf16.mxu0 0
  %1066 = vmatpush2.bf16.msra.mxu0 0
  %1067 = vmatprep.subr.bf16.mxu0 0
  %1068 = vmatpush2.bf16.msra.mxu0 0
  %1069 = vmatprep.subr.bf16.mxu0 0
  %1070 = vmatpush2.bf16.msra.mxu0 0
  %1071 = vmatprep.subr.bf16.mxu0 0
  %1072 = vmatpush2.bf16.msra.mxu0 0
  %1073 = vmatprep.mubr.bf16.mxu0 0
  %1074 = vmatmul.mubr.bf16.gmra.mxu0 %v1033
  %v1075 = vpop.f32.mrf.mxu0
  %v1076 = vadd.f32 0.0, %v1075
  %v1077 = vpop.f32.mrf.mxu0
  %v1078 = vadd.f32 0.0, %v1077
  %v1079 = vpop.f32.mrf.mxu0
  %v1080 = vpop.f32.mrf.mxu0
  %1081 = vdwg.mxu0
  %v1083 = vsel %vm102, %v1019, 0
  %v1086 = vsel %vm115, %v1028, 0
  %v1089 = vsel %vm115, %v1029, 0
  %1091 = vmatprep.subr.bf16.mxu0 0
  %1092 = vmatpush1.bf16.msra.mxu0 0
  %1093 = vmatprep.subr.bf16.mxu0 0
  %1094 = vmatpush1.bf16.msra.mxu0 0
  %1095 = vmatprep.subr.bf16.mxu0 0
  %1096 = vmatpush1.bf16.msra.mxu0 0
  %1097 = vmatprep.subr.bf16.mxu0 0
  %1098 = vmatpush1.bf16.msra.mxu0 0
  %1099 = vmatprep.subr.bf16.mxu0 0
  %1100 = vmatpush1.bf16.msra.mxu0 0
  %1101 = vmatprep.subr.bf16.mxu0 0
  %1102 = vmatpush1.bf16.msra.mxu0 0
  %1103 = vmatprep.subr.bf16.mxu0 0
  %1104 = vmatpush1.bf16.msra.mxu0 0
  %1105 = vmatprep.subr.bf16.mxu0 %v1089
  %1106 = vmatpush1.bf16.msra.mxu0 %v1086
  %1107 = vmatprep.subr.bf16.mxu0 0
  %1108 = vmatpush2.bf16.msra.mxu0 0
  %1109 = vmatprep.subr.bf16.mxu0 0
  %1110 = vmatpush2.bf16.msra.mxu0 0
  %1111 = vmatprep.subr.bf16.mxu0 0
  %1112 = vmatpush2.bf16.msra.mxu0 0
  %1113 = vmatprep.subr.bf16.mxu0 0
  %1114 = vmatpush2.bf16.msra.mxu0 0
  %1115 = vmatprep.subr.bf16.mxu0 0
  %1116 = vmatpush2.bf16.msra.mxu0 0
  %1117 = vmatprep.subr.bf16.mxu0 0
  %1118 = vmatpush2.bf16.msra.mxu0 0
  %1119 = vmatprep.subr.bf16.mxu0 0
  %1120 = vmatpush2.bf16.msra.mxu0 0
  %1121 = vmatprep.subr.bf16.mxu0 0
  %1122 = vmatpush2.bf16.msra.mxu0 0
  %1123 = vmatprep.mubr.bf16.mxu0 0
  %1124 = vmatmul.mubr.bf16.gmra.mxu0 %v1083
  %v1125 = vpop.f32.mrf.mxu0
  %v1126 = vadd.f32 %v1076, %v1125
  %v1127 = vpop.f32.mrf.mxu0
  %v1128 = vadd.f32 %v1078, %v1127
  %v1129 = vpop.f32.mrf.mxu0
  %v1130 = vpop.f32.mrf.mxu0
  %1131 = vdwg.mxu0
  %v1133 = vlaneseq
  %v1134 = vshrl.u32 %v1133, 7
  %v1135 = vsub.s32 0, %v1134
  %v1136 = vrot.slane %v57, %v1135
  %v1137 = vlaneseq
  %v1138 = vshrl.u32 %v1137, 7
  %v1139 = vsub.s32 1, %v1138
  %v1140 = vrot.slane %v57, %v1139
  %v1143 = vadd.f32 %v1126, %v1136
  %v1144 = vadd.f32 %v1128, %v1140
  %v1145 = vpack.c.bf16 %v1008, %v1008
  %v1154 = vunpack.c.l.b16 %v49
  %v1155 = vunpack.c.h.b16 %v49
  %v1156 = vunpack.c.l.b16 %v50
  %v1157 = vunpack.c.h.b16 %v50
  %v1158 = vunpack.c.l.b16 %v51
  %v1159 = vunpack.c.h.b16 %v51
  %v1160 = vunpack.c.l.b16 %v52
  %v1161 = vunpack.c.h.b16 %v52
  %v1162 = vunpack.c.l.b16 %v53
  %v1163 = vunpack.c.h.b16 %v53
  %v1164 = vunpack.c.l.b16 %v54
  %v1165 = vunpack.c.h.b16 %v54
  %v1166 = vunpack.c.l.b16 %v55
  %v1167 = vunpack.c.h.b16 %v55
  %v1168 = vunpack.c.l.b16 %v56
  %v1169 = vunpack.c.h.b16 %v56
  %v1170 = vpack.c.b16 %v1156, %v1154
  %v1171 = vpack.c.b16 %v1157, %v1155
  %v1172 = vpack.c.b16 %v1160, %v1158
  %v1173 = vpack.c.b16 %v1161, %v1159
  %v1174 = vpack.c.b16 %v1164, %v1162
  %v1175 = vpack.c.b16 %v1165, %v1163
  %v1176 = vpack.c.b16 %v1168, %v1166
  %v1177 = vpack.c.b16 %v1169, %v1167
  %v1187 = vsel %vm353, %v1145, 0
  %1189 = vmatprep.subr.bf16.mxu0 0
  %1190 = vmatpush1.bf16.msra.mxu0 0
  %1191 = vmatprep.subr.bf16.mxu0 0
  %1192 = vmatpush1.bf16.msra.mxu0 0
  %1193 = vmatprep.subr.bf16.mxu0 0
  %1194 = vmatpush1.bf16.msra.mxu0 0
  %1195 = vmatprep.subr.bf16.mxu0 0
  %1196 = vmatpush1.bf16.msra.mxu0 0
  %1197 = vmatprep.subr.bf16.mxu0 %v1177
  %1198 = vmatpush1.bf16.msra.mxu0 %v1176
  %1199 = vmatprep.subr.bf16.mxu0 %v1175
  %1200 = vmatpush1.bf16.msra.mxu0 %v1174
  %1201 = vmatprep.subr.bf16.mxu0 %v1173
  %1202 = vmatpush1.bf16.msra.mxu0 %v1172
  %1203 = vmatprep.subr.bf16.mxu0 %v1171
  %1204 = vmatpush1.bf16.msra.mxu0 %v1170
  %1205 = vmatprep.subr.bf16.mxu0 0
  %1206 = vmatpush2.bf16.msra.mxu0 0
  %1207 = vmatprep.subr.bf16.mxu0 0
  %1208 = vmatpush2.bf16.msra.mxu0 0
  %1209 = vmatprep.subr.bf16.mxu0 0
  %1210 = vmatpush2.bf16.msra.mxu0 0
  %1211 = vmatprep.subr.bf16.mxu0 0
  %1212 = vmatpush2.bf16.msra.mxu0 0
  %1213 = vmatprep.subr.bf16.mxu0 0
  %1214 = vmatpush2.bf16.msra.mxu0 0
  %1215 = vmatprep.subr.bf16.mxu0 0
  %1216 = vmatpush2.bf16.msra.mxu0 0
  %1217 = vmatprep.subr.bf16.mxu0 0
  %1218 = vmatpush2.bf16.msra.mxu0 0
  %1219 = vmatprep.subr.bf16.mxu0 0
  %1220 = vmatpush2.bf16.msra.mxu0 0
  %1221 = vmatprep.mubr.bf16.mxu0 0
  %1222 = vmatmul.mubr.bf16.gmra.mxu0 %v1187
  %v1223 = vpop.f32.mrf.mxu0
  %v1224 = vadd.f32 0.0, %v1223
  %v1225 = vpop.f32.mrf.mxu0
  %v1226 = vadd.f32 0.0, %v1225
  %v1227 = vpop.f32.mrf.mxu0
  %v1228 = vpop.f32.mrf.mxu0
  %1229 = vdwg.mxu0
  %v1230 = vadd.f32 %v1143, %v1224
  %v1231 = vadd.f32 %v1144, %v1226
  %v1232 = vxor.u32 %v1230, 2147483648
  %v1233 = vxor.u32 %v1231, 2147483648
  %v1234 = vmul.f32 %v1232, 1.442695
  %v1235 = vpow.pop %v1234
  %v1236 = vmul.f32 %v1233, 1.442695
  %v1237 = vpow.pop %v1236
  %v1238 = vadd.f32 %v1235, 1.0
  %v1239 = vadd.f32 %v1237, 1.0
  %v1240 = vrcp.pop %v1238
  %v1241 = vmul.f32 1.0, %v1240
  %v1242 = vrcp.pop %v1239
  %v1243 = vmul.f32 1.0, %v1242
  %v1244 = vmul.f32 %v1243, 2.0
  %v1245 = vsub.f32 %v1244, 1.0
  %1247 = vrot.lane.b32.xlu0 %v1018, 64
  %v1248 = vpop.permute.xlu0 %1247
  %v1250 = vmul.f32 %v1241, %v1248
  %v1251 = vmul.f32 %v1241, %v1245
  %1253 = vrot.lane.b32.xlu0 %v1251, 64
  %v1254 = vpop.permute.xlu0 %1253
  %v1256 = vadd.f32 %v1250, %v1254
  %v1257 = vmul.f32 %v1256, 2.0
  %v1258 = vxor.u32 %v1257, 2147483648
  %v1259 = vmul.f32 %v1258, 1.442695
  %v1260 = vpow.pop %v1259
  %v1261 = vadd.f32 %v1260, 1.0
  %v1262 = vrcp.pop %v1261
  %v1263 = vmul.f32 1.0, %v1262
  %v1264 = vmul.f32 %v1263, 2.0
  %v1265 = vsub.f32 %v1264, 1.0
  %v1266 = vmul.f32 %v1243, %v1265
  %v1267 = vpack.c.bf16 %v1266, %v1266
  %1269 = vrot.lane.b32.xlu0 %v1267, 64
  %v1270 = vpop.permute.xlu0 %1269
  %v1272 = vsel %vm353, %v1270, 0
  %1274 = vmatprep.subr.bf16.mxu0 0
  %1275 = vmatpush1.bf16.msra.mxu0 0
  %1276 = vmatprep.subr.bf16.mxu0 0
  %1277 = vmatpush1.bf16.msra.mxu0 0
  %1278 = vmatprep.subr.bf16.mxu0 0
  %1279 = vmatpush1.bf16.msra.mxu0 0
  %1280 = vmatprep.subr.bf16.mxu0 0
  %1281 = vmatpush1.bf16.msra.mxu0 0
  %1282 = vmatprep.subr.bf16.mxu0 %v1177
  %1283 = vmatpush1.bf16.msra.mxu0 %v1176
  %1284 = vmatprep.subr.bf16.mxu0 %v1175
  %1285 = vmatpush1.bf16.msra.mxu0 %v1174
  %1286 = vmatprep.subr.bf16.mxu0 %v1173
  %1287 = vmatpush1.bf16.msra.mxu0 %v1172
  %1288 = vmatprep.subr.bf16.mxu0 %v1171
  %1289 = vmatpush1.bf16.msra.mxu0 %v1170
  %1290 = vmatprep.subr.bf16.mxu0 0
  %1291 = vmatpush2.bf16.msra.mxu0 0
  %1292 = vmatprep.subr.bf16.mxu0 0
  %1293 = vmatpush2.bf16.msra.mxu0 0
  %1294 = vmatprep.subr.bf16.mxu0 0
  %1295 = vmatpush2.bf16.msra.mxu0 0
  %1296 = vmatprep.subr.bf16.mxu0 0
  %1297 = vmatpush2.bf16.msra.mxu0 0
  %1298 = vmatprep.subr.bf16.mxu0 0
  %1299 = vmatpush2.bf16.msra.mxu0 0
  %1300 = vmatprep.subr.bf16.mxu0 0
  %1301 = vmatpush2.bf16.msra.mxu0 0
  %1302 = vmatprep.subr.bf16.mxu0 0
  %1303 = vmatpush2.bf16.msra.mxu0 0
  %1304 = vmatprep.subr.bf16.mxu0 0
  %1305 = vmatpush2.bf16.msra.mxu0 0
  %1306 = vmatprep.mubr.bf16.mxu0 0
  %1307 = vmatmul.mubr.bf16.gmra.mxu0 %v1272
  %v1308 = vpop.f32.mrf.mxu0
  %v1309 = vadd.f32 0.0, %v1308
  %v1310 = vpop.f32.mrf.mxu0
  %v1311 = vadd.f32 0.0, %v1310
  %v1312 = vpop.f32.mrf.mxu0
  %v1313 = vpop.f32.mrf.mxu0
  %1314 = vdwg.mxu0
  %v1315 = vadd.f32 %v1143, %v1309
  %v1316 = vadd.f32 %v1144, %v1311
  %v1317 = vxor.u32 %v1315, 2147483648
  %v1318 = vxor.u32 %v1316, 2147483648
  %v1319 = vmul.f32 %v1317, 1.442695
  %v1320 = vpow.pop %v1319
  %v1321 = vmul.f32 %v1318, 1.442695
  %v1322 = vpow.pop %v1321
  %v1323 = vadd.f32 %v1320, 1.0
  %v1324 = vadd.f32 %v1322, 1.0
  %v1325 = vrcp.pop %v1323
  %v1326 = vmul.f32 1.0, %v1325
  %v1327 = vrcp.pop %v1324
  %v1328 = vmul.f32 1.0, %v1327
  %v1329 = vmul.f32 %v1328, 2.0
  %v1330 = vsub.f32 %v1329, 1.0
  %v1331 = vmul.f32 %v1326, %v1256
  %v1332 = vmul.f32 %v1326, %v1330
  %1334 = vrot.lane.b32.xlu0 %v1332, 64
  %v1335 = vpop.permute.xlu0 %1334
  %v1337 = vadd.f32 %v1331, %v1335
  %v1338 = vmul.f32 %v1337, 2.0
  %v1339 = vxor.u32 %v1338, 2147483648
  %v1340 = vmul.f32 %v1339, 1.442695
  %v1341 = vpow.pop %v1340
  %v1342 = vadd.f32 %v1341, 1.0
  %v1343 = vrcp.pop %v1342
  %v1344 = vmul.f32 1.0, %v1343
  %v1345 = vmul.f32 %v1344, 2.0
  %v1346 = vsub.f32 %v1345, 1.0
  %v1347 = vmul.f32 %v1328, %v1346
  %v1348 = vpack.c.bf16 %v1347, %v1347
  %1350 = vrot.lane.b32.xlu0 %v1348, 64
  %v1351 = vpop.permute.xlu0 %1350
  %v1353 = vsel %vm353, %v1351, 0
  %1355 = vmatprep.subr.bf16.mxu0 0
  %1356 = vmatpush1.bf16.msra.mxu0 0
  %1357 = vmatprep.subr.bf16.mxu0 0
  %1358 = vmatpush1.bf16.msra.mxu0 0
  %1359 = vmatprep.subr.bf16.mxu0 0
  %1360 = vmatpush1.bf16.msra.mxu0 0
  %1361 = vmatprep.subr.bf16.mxu0 0
  %1362 = vmatpush1.bf16.msra.mxu0 0
  %1363 = vmatprep.subr.bf16.mxu0 %v1177
  %1364 = vmatpush1.bf16.msra.mxu0 %v1176
  %1365 = vmatprep.subr.bf16.mxu0 %v1175
  %1366 = vmatpush1.bf16.msra.mxu0 %v1174
  %1367 = vmatprep.subr.bf16.mxu0 %v1173
  %1368 = vmatpush1.bf16.msra.mxu0 %v1172
  %1369 = vmatprep.subr.bf16.mxu0 %v1171
  %1370 = vmatpush1.bf16.msra.mxu0 %v1170
  %1371 = vmatprep.subr.bf16.mxu0 0
  %1372 = vmatpush2.bf16.msra.mxu0 0
  %1373 = vmatprep.subr.bf16.mxu0 0
  %1374 = vmatpush2.bf16.msra.mxu0 0
  %1375 = vmatprep.subr.bf16.mxu0 0
  %1376 = vmatpush2.bf16.msra.mxu0 0
  %1377 = vmatprep.subr.bf16.mxu0 0
  %1378 = vmatpush2.bf16.msra.mxu0 0
  %1379 = vmatprep.subr.bf16.mxu0 0
  %1380 = vmatpush2.bf16.msra.mxu0 0
  %1381 = vmatprep.subr.bf16.mxu0 0
  %1382 = vmatpush2.bf16.msra.mxu0 0
  %1383 = vmatprep.subr.bf16.mxu0 0
  %1384 = vmatpush2.bf16.msra.mxu0 0
  %1385 = vmatprep.subr.bf16.mxu0 0
  %1386 = vmatpush2.bf16.msra.mxu0 0
  %1387 = vmatprep.mubr.bf16.mxu0 0
  %1388 = vmatmul.mubr.bf16.gmra.mxu0 %v1353
  %v1389 = vpop.f32.mrf.mxu0
  %v1390 = vadd.f32 0.0, %v1389
  %v1391 = vpop.f32.mrf.mxu0
  %v1392 = vadd.f32 0.0, %v1391
  %v1393 = vpop.f32.mrf.mxu0
  %v1394 = vpop.f32.mrf.mxu0
  %1395 = vdwg.mxu0
  %v1396 = vadd.f32 %v1143, %v1390
  %v1397 = vadd.f32 %v1144, %v1392
  %v1398 = vxor.u32 %v1396, 2147483648
  %v1399 = vxor.u32 %v1397, 2147483648
  %v1400 = vmul.f32 %v1398, 1.442695
  %v1401 = vpow.pop %v1400
  %v1402 = vmul.f32 %v1399, 1.442695
  %v1403 = vpow.pop %v1402
  %v1404 = vadd.f32 %v1401, 1.0
  %v1405 = vadd.f32 %v1403, 1.0
  %v1406 = vrcp.pop %v1404
  %v1407 = vmul.f32 1.0, %v1406
  %v1408 = vrcp.pop %v1405
  %v1409 = vmul.f32 1.0, %v1408
  %v1410 = vmul.f32 %v1409, 2.0
  %v1411 = vsub.f32 %v1410, 1.0
  %v1412 = vmul.f32 %v1407, %v1337
  %v1413 = vmul.f32 %v1407, %v1411
  %1415 = vrot.lane.b32.xlu0 %v1413, 64
  %v1416 = vpop.permute.xlu0 %1415
  %v1418 = vadd.f32 %v1412, %v1416
  %v1419 = vmul.f32 %v1418, 2.0
  %v1420 = vxor.u32 %v1419, 2147483648
  %v1421 = vmul.f32 %v1420, 1.442695
  %v1422 = vpow.pop %v1421
  %v1423 = vadd.f32 %v1422, 1.0
  %v1424 = vrcp.pop %v1423
  %v1425 = vmul.f32 1.0, %v1424
  %v1426 = vmul.f32 %v1425, 2.0
  %v1427 = vsub.f32 %v1426, 1.0
  %v1428 = vmul.f32 %v1409, %v1427
  %v1429 = vpack.c.bf16 %v1428, %v1428
  %1431 = vrot.lane.b32.xlu0 %v1429, 64
  %v1432 = vpop.permute.xlu0 %1431
  %v1434 = vsel %vm353, %v1432, 0
  %1436 = vmatprep.subr.bf16.mxu0 0
  %1437 = vmatpush1.bf16.msra.mxu0 0
  %1438 = vmatprep.subr.bf16.mxu0 0
  %1439 = vmatpush1.bf16.msra.mxu0 0
  %1440 = vmatprep.subr.bf16.mxu0 0
  %1441 = vmatpush1.bf16.msra.mxu0 0
  %1442 = vmatprep.subr.bf16.mxu0 0
  %1443 = vmatpush1.bf16.msra.mxu0 0
  %1444 = vmatprep.subr.bf16.mxu0 %v1177
  %1445 = vmatpush1.bf16.msra.mxu0 %v1176
  %1446 = vmatprep.subr.bf16.mxu0 %v1175
  %1447 = vmatpush1.bf16.msra.mxu0 %v1174
  %1448 = vmatprep.subr.bf16.mxu0 %v1173
  %1449 = vmatpush1.bf16.msra.mxu0 %v1172
  %1450 = vmatprep.subr.bf16.mxu0 %v1171
  %1451 = vmatpush1.bf16.msra.mxu0 %v1170
  %1452 = vmatprep.subr.bf16.mxu0 0
  %1453 = vmatpush2.bf16.msra.mxu0 0
  %1454 = vmatprep.subr.bf16.mxu0 0
  %1455 = vmatpush2.bf16.msra.mxu0 0
  %1456 = vmatprep.subr.bf16.mxu0 0
  %1457 = vmatpush2.bf16.msra.mxu0 0
  %1458 = vmatprep.subr.bf16.mxu0 0
  %1459 = vmatpush2.bf16.msra.mxu0 0
  %1460 = vmatprep.subr.bf16.mxu0 0
  %1461 = vmatpush2.bf16.msra.mxu0 0
  %1462 = vmatprep.subr.bf16.mxu0 0
  %1463 = vmatpush2.bf16.msra.mxu0 0
  %1464 = vmatprep.subr.bf16.mxu0 0
  %1465 = vmatpush2.bf16.msra.mxu0 0
  %1466 = vmatprep.subr.bf16.mxu0 0
  %1467 = vmatpush2.bf16.msra.mxu0 0
  %1468 = vmatprep.mubr.bf16.mxu0 0
  %1469 = vmatmul.mubr.bf16.gmra.mxu0 %v1434
  %v1470 = vpop.f32.mrf.mxu0
  %v1471 = vadd.f32 0.0, %v1470
  %v1472 = vpop.f32.mrf.mxu0
  %v1473 = vadd.f32 0.0, %v1472
  %v1474 = vpop.f32.mrf.mxu0
  %v1475 = vpop.f32.mrf.mxu0
  %1476 = vdwg.mxu0
  %v1477 = vadd.f32 %v1143, %v1471
  %v1478 = vadd.f32 %v1144, %v1473
  %v1479 = vxor.u32 %v1477, 2147483648
  %v1480 = vxor.u32 %v1478, 2147483648
  %v1481 = vmul.f32 %v1479, 1.442695
  %v1482 = vpow.pop %v1481
  %v1483 = vmul.f32 %v1480, 1.442695
  %v1484 = vpow.pop %v1483
  %v1485 = vadd.f32 %v1482, 1.0
  %v1486 = vadd.f32 %v1484, 1.0
  %v1487 = vrcp.pop %v1485
  %v1488 = vmul.f32 1.0, %v1487
  %v1489 = vrcp.pop %v1486
  %v1490 = vmul.f32 1.0, %v1489
  %v1491 = vmul.f32 %v1490, 2.0
  %v1492 = vsub.f32 %v1491, 1.0
  %v1493 = vmul.f32 %v1488, %v1418
  %v1494 = vmul.f32 %v1488, %v1492
  %1496 = vrot.lane.b32.xlu0 %v1494, 64
  %v1497 = vpop.permute.xlu0 %1496
  %v1499 = vadd.f32 %v1493, %v1497
  %v1500 = vmul.f32 %v1499, 2.0
  %v1501 = vxor.u32 %v1500, 2147483648
  %v1502 = vmul.f32 %v1501, 1.442695
  %v1503 = vpow.pop %v1502
  %v1504 = vadd.f32 %v1503, 1.0
  %v1505 = vrcp.pop %v1504
  %v1506 = vmul.f32 1.0, %v1505
  %v1507 = vmul.f32 %v1506, 2.0
  %v1508 = vsub.f32 %v1507, 1.0
  %v1509 = vmul.f32 %v1490, %v1508
  %v1510 = vpack.c.bf16 %v1347, %v1266
  %v1511 = vpack.c.bf16 %v1509, %v1428
  %v1513 = vlaneseq
  %v1514 = vshrl.u32 %v1513, 7
  %v1515 = vsub.s32 0, %v1514
  %v1516 = vrot.slane %v66, %v1515
  %1520 = vrot.lane.b32.xlu0 %v1510, 64
  %v1521 = vpop.permute.xlu0 %1520
  %1522 = vrot.lane.b32.xlu0 %v1511, 64
  %v1523 = vpop.permute.xlu0 %1522
  %v1532 = vunpack.c.l.b16 %v58
  %v1533 = vunpack.c.l.b16 %v59
  %v1534 = vunpack.c.l.b16 %v60
  %v1535 = vunpack.c.l.b16 %v61
  %v1536 = vunpack.c.l.b16 %v62
  %v1537 = vunpack.c.l.b16 %v63
  %v1538 = vunpack.c.l.b16 %v64
  %v1539 = vunpack.c.l.b16 %v65
  %v1540 = vpack.c.b16 %v1533, %v1532
  %v1541 = vpack.c.b16 %v1535, %v1534
  %v1542 = vpack.c.b16 %v1537, %v1536
  %v1543 = vpack.c.b16 %v1539, %v1538
  %v1549 = vsel %vm353, %v1521, 0
  %v1552 = vsel %vm353, %v1523, 0
  %1554 = vmatprep.subr.bf16.mxu0 0
  %1555 = vmatpush1.bf16.msra.mxu0 0
  %1556 = vmatprep.subr.bf16.mxu0 0
  %1557 = vmatpush1.bf16.msra.mxu0 0
  %1558 = vmatprep.subr.bf16.mxu0 0
  %1559 = vmatpush1.bf16.msra.mxu0 0
  %1560 = vmatprep.subr.bf16.mxu0 0
  %1561 = vmatpush1.bf16.msra.mxu0 0
  %1562 = vmatprep.subr.bf16.mxu0 0
  %1563 = vmatpush1.bf16.msra.mxu0 %v1543
  %1564 = vmatprep.subr.bf16.mxu0 0
  %1565 = vmatpush1.bf16.msra.mxu0 %v1542
  %1566 = vmatprep.subr.bf16.mxu0 0
  %1567 = vmatpush1.bf16.msra.mxu0 %v1541
  %1568 = vmatprep.subr.bf16.mxu0 0
  %1569 = vmatpush1.bf16.msra.mxu0 %v1540
  %1570 = vmatprep.subr.bf16.mxu0 0
  %1571 = vmatpush2.bf16.msra.mxu0 0
  %1572 = vmatprep.subr.bf16.mxu0 0
  %1573 = vmatpush2.bf16.msra.mxu0 0
  %1574 = vmatprep.subr.bf16.mxu0 0
  %1575 = vmatpush2.bf16.msra.mxu0 0
  %1576 = vmatprep.subr.bf16.mxu0 0
  %1577 = vmatpush2.bf16.msra.mxu0 0
  %1578 = vmatprep.subr.bf16.mxu0 0
  %1579 = vmatpush2.bf16.msra.mxu0 0
  %1580 = vmatprep.subr.bf16.mxu0 0
  %1581 = vmatpush2.bf16.msra.mxu0 0
  %1582 = vmatprep.subr.bf16.mxu0 0
  %1583 = vmatpush2.bf16.msra.mxu0 0
  %1584 = vmatprep.subr.bf16.mxu0 0
  %1585 = vmatpush2.bf16.msra.mxu0 0
  %1586 = vmatprep.mubr.bf16.mxu0 0
  %1587 = vmatmul.mubr.bf16.gmra.mxu0 %v1549
  %v1588 = vpop.f32.mrf.mxu0
  %v1589 = vadd.f32 %v1516, %v1588
  %v1590 = vpop.f32.mrf.mxu0
  %v1591 = vpop.f32.mrf.mxu0
  %v1592 = vadd.f32 %v1516, %v1591
  %v1593 = vpop.f32.mrf.mxu0
  %1594 = vmatprep.mubr.bf16.mxu0 0
  %1595 = vmatmul.mubr.bf16.gmra.mxu0 %v1552
  %v1596 = vpop.f32.mrf.mxu0
  %v1597 = vadd.f32 %v1516, %v1596
  %v1598 = vpop.f32.mrf.mxu0
  %v1599 = vpop.f32.mrf.mxu0
  %v1600 = vadd.f32 %v1516, %v1599
  %v1601 = vpop.f32.mrf.mxu0
  %1602 = vdwg.mxu0
  %1603 = vst.msk [vmem:[%s11] sm:$0xff] %vm102, %v1589
  %1604 = vst.msk [vmem:[%s11 + $0x8] sm:$0xff] %vm102, %v1592
  %1605 = vst.msk [vmem:[%s11 + $0x10] sm:$0xff] %vm102, %v1597
  %1606 = vst.msk [vmem:[%s11 + $0x18] sm:$0xff] %vm102, %v1600
  %1611 = vrot.lane.b32.xlu0 %v1589, 126
  %v1612 = vpop.permute.xlu0 %1611
  %1613 = vrot.lane.b32.xlu0 %v1592, 126
  %v1614 = vpop.permute.xlu0 %1613
  %1615 = vrot.lane.b32.xlu0 %v1597, 126
  %v1616 = vpop.permute.xlu0 %1615
  %1617 = vrot.lane.b32.xlu0 %v1600, 126
  %v1618 = vpop.permute.xlu0 %1617
  %1623 = vst.msk [vmem:[%s10] sm:$0xff] %vm102, %v1612
  %1624 = vst.msk [vmem:[%s10 + $0x8] sm:$0xff] %vm102, %v1614
  %1625 = vst.msk [vmem:[%s10 + $0x10] sm:$0xff] %vm102, %v1616
  %1626 = vst.msk [vmem:[%s10 + $0x18] sm:$0xff] %vm102, %v1618
  // Predicated region
  $region42: #{tpu_custom_call.1} parent=0 // pred_check
    _
  $region43: #{tpu_custom_call.1} parent=0 // pred_check_branch
    %1628 = sbr.rel (0) target = $region45
  $region44: #{tpu_custom_call.1} parent=0 // pred_region
    _
  $region45: #{tpu_custom_call.1} parent=0 // pred_fallthru
    _
  // Predicated region
  $region46: #{tpu_custom_call.1} parent=0 // pred_check
    _
  $region47: #{tpu_custom_call.1} parent=0 // pred_check_branch
    %1630 = sbr.rel (0) target = $region49
  $region48: #{tpu_custom_call.1} parent=0 // pred_region
    _
  $region49: #{tpu_custom_call.1} parent=0 // pred_fallthru
    _
  // Predicated region
  $region50: #{tpu_custom_call.1} parent=0 // pred_check
    _
  $region51: #{tpu_custom_call.1} parent=0 // pred_check_branch
    %1632 = sbr.rel (0) target = $region53
  $region52: #{tpu_custom_call.1} parent=0 // pred_region
    _
  $region53: #{tpu_custom_call.1} parent=0 // pred_fallthru
    _
  // Predicated region
  $region54: #{tpu_custom_call.1} parent=0 // pred_check
    _
  $region55: #{tpu_custom_call.1} parent=0 // pred_check_branch
    %1634 = sbr.rel (0) target = $region57
  $region56: #{tpu_custom_call.1} parent=0 // pred_region
    _
  $region57: #{tpu_custom_call.1} parent=0 // pred_fallthru
    _

</llo_original>
